<compile_context>
chip_gen: v5e
topology: v5e:2x2
jax: 0.10.0
libtpu: 0.0.40
codegen_flags: <defaults>
</compile_context>

<pallas_src>
import functools

import jax
import jax.numpy as jnp
from jax.experimental import pallas as pl
from jax.experimental.pallas import tpu as pltpu


def _aspp_kernel(x_ref, w_ref, o_ref, xpad_ref, acc_ref, *, kernel_size, dilation,
                 wp, height, width, pad, out_h, out_w, acc_cols, negative_slope):
    # x_ref    : (Cin, H*W)       un-padded, row-flattened input (one batch elem), f32
    # w_ref    : (K*K, Cout, Cin) spectrally-normalized per-tap weights, bf16
    # o_ref    : (Cout, H_out, W_out) NCHW output block (no wrapper crop needed)
    # xpad_ref : (Cin, hp*wp)     zero-padded, row-flattened input, bf16 (built here)
    # acc_ref  : (Cout, acc_cols) f32 staging for the lane-dense accumulator
    cin = x_ref.shape[0]
    cout = w_ref.shape[1]
    K, d = kernel_size, dilation

    # ---- Fold the zero padding into the kernel (no jnp.pad HBM pass). -------
    xpad_ref[...] = jnp.zeros_like(xpad_ref)
    for h in range(height):
        dst = (h + pad) * wp + pad
        xpad_ref[:, dst:dst + width] = (
            x_ref[:, h * width:(h + 1) * width].astype(xpad_ref.dtype))

    # ---- Tap-accumulated matmuls; no im2col slab. ----------------------------
    # Each tap (kh, kw) is a *contiguous* lane-axis slice of the flattened padded
    # image: off = d*(kh*wp + kw).  All offsets are static Python ints, so the
    # K*K loop is fully unrolled for the LLO scheduler and the accumulator stays
    # in vregs across it.  Columns j with (j mod wp) >= W_out (and the <128 tail
    # lanes) are wrap-around garbage and are simply never stored.
    acc = jnp.zeros((cout, acc_cols), jnp.float32)
    for kh in range(K):
        for kw in range(K):
            off = d * (kh * wp + kw)
            acc = acc + jnp.dot(w_ref[kh * K + kw],                    # (Cout, Cin) bf16
                                xpad_ref[:, off:off + acc_cols],       # (Cin, L)    bf16
                                preferred_element_type=jnp.float32)

    # ---- LeakyReLU(0.2) epilogue + direct NCHW store (crop done here). -------
    acc_ref[...] = acc
    for h in range(out_h):
        v = acc_ref[:, h * wp:h * wp + out_w]
        o_ref[:, h, :] = jnp.where(v > 0, v, negative_slope * v).astype(o_ref.dtype)


def spectral_normalize(weight, u, n_power_iterations=1, eps=1e-12):
    """torch.nn.utils.spectral_norm weight scaling (training-mode forward).

    Returns (normalized_weight, updated_u); PyTorch mutates the `u` buffer every
    forward, so callers thread `updated_u` back in for multi-step parity.
    """
    cout = weight.shape[0]
    w_mat = weight.reshape(cout, -1)  # (Cout, Cin*K*K), same flattening as PyTorch

    def _l2n(v):
        return v / (jnp.linalg.norm(v) + eps)

    v = None
    for _ in range(n_power_iterations):
        v = _l2n(w_mat.T @ u)
        u = _l2n(w_mat @ v)
    sigma = jnp.dot(u, w_mat @ v)
    return weight / sigma, u


def aspp_module_forward(x_nchw, weight, u, *, padding, dilation,
                        negative_slope=0.2):
    """x_nchw: (N, Cin, H, W) f32; weight: (Cout, Cin, K, K) raw (pre-spectral-norm).

    Returns (out_nchw, u_new) where u_new is the power-iteration-updated vector
    (PyTorch's spectral_norm buffer).
    """
    N, Cin, H, W = x_nchw.shape
    Cout, _, K, _ = weight.shape
    span = dilation * (K - 1)
    H_out = H + 2 * padding - span
    W_out = W + 2 * padding - span

    # --- plain-JAX glue: spectral norm + per-tap weight packing (bf16) --------
    w_sn, u_new = spectral_normalize(weight, u)
    # (Cout, Cin, K, K) -> (K*K, Cout, Cin): clean first-axis tap indexing inside
    # the kernel; bf16 operand for native MXU passes on v5e/v6e/v7x.
    w_taps = jnp.transpose(w_sn, (2, 3, 0, 1)).reshape(K * K, Cout, Cin)
    w_taps = w_taps.astype(jnp.bfloat16)

    # --- lane-dense geometry ---------------------------------------------------
    wp = W_out + span                          # padded row width (== W + 2*padding)
    L_valid = H_out * wp
    L = ((L_valid + 127) // 128) * 128         # pad only the tail of the lane extent
    off_max = span * (wp + 1)                  # largest tap offset
    hp = -(-(off_max + L) // wp)               # padded rows so every tap read is in bounds
    # Invariant (keeps all VMEM reads in bounds; no runtime OOB check exists):
    assert off_max + L <= hp * wp
    assert hp >= H + 2 * padding and wp >= W + 2 * padding

    # Free reshape (contiguous last two dims); no pad / cast pass in HBM.
    x_flat = x_nchw.reshape(N, Cin, H * W)

    kernel = functools.partial(
        _aspp_kernel, kernel_size=K, dilation=dilation, wp=wp, height=H, width=W,
        pad=padding, out_h=H_out, out_w=W_out, acc_cols=L,
        negative_slope=negative_slope)

    out = pl.pallas_call(
        kernel,
        out_shape=jax.ShapeDtypeStruct((N, Cout, H_out, W_out), x_nchw.dtype),
        grid_spec=pltpu.PrefetchScalarGridSpec(
            num_scalar_prefetch=0,
            # grid over batch, marked parallel (with N=2 both v7x TCs get a block);
            # at production sizes a second "parallel" row-band axis goes here.
            grid=(N,),
            in_specs=[
                pl.BlockSpec((None, Cin, H * W), lambda n: (n, 0, 0)),
                pl.BlockSpec((K * K, Cout, Cin), lambda n: (0, 0, 0)),
            ],
            out_specs=pl.BlockSpec((None, Cout, H_out, W_out),
                                   lambda n: (n, 0, 0, 0)),
            scratch_shapes=[
                pltpu.VMEM((Cin, hp * wp), jnp.bfloat16),   # padded input (built in-kernel)
                pltpu.VMEM((Cout, L), jnp.float32),         # f32 accumulator staging
            ],
        ),
        compiler_params=pltpu.CompilerParams(
            dimension_semantics=("parallel",),
            vmem_limit_bytes=32 * 1024 * 1024),
    )(x_flat, w_taps)

    return out, u_new


def reference_forward(x_nchw, weight, u, *, padding, dilation, negative_slope=0.2):
    """Pure-JAX reference (f32 dilated conv, HIGHEST precision) for correctness."""
    w_sn, u_new = spectral_normalize(weight, u)
    y = jax.lax.conv_general_dilated(
        x_nchw, w_sn,
        window_strides=(1, 1),
        padding=((padding, padding), (padding, padding)),
        rhs_dilation=(dilation, dilation),
        dimension_numbers=("NCHW", "OIHW", "NCHW"),
        precision=jax.lax.Precision.HIGHEST,
    )
    return jnp.where(y > 0, y, negative_slope * y), u_new


if __name__ == "__main__":
    # _ASPPModule(inplanes=4, planes=8, kernel_size=3, padding=2, dilation=2)
    N, Cin, H, W = 2, 4, 16, 16
    Cout, K, padding, dilation = 8, 3, 2, 2

    key = jax.random.PRNGKey(0)
    kx, kw, ku = jax.random.split(key, 3)

    x = jax.random.normal(kx, (N, Cin, H, W), dtype=jnp.float32)
    weight = jax.random.normal(kw, (Cout, Cin, K, K), dtype=jnp.float32) * 0.1
    u0 = jax.random.normal(ku, (Cout,), dtype=jnp.float32)
    u0 = u0 / (jnp.linalg.norm(u0) + 1e-12)

    out, u_new = aspp_module_forward(x, weight, u0, padding=padding,
                                     dilation=dilation)
    out = jax.block_until_ready(out)

    ref, u_ref = reference_forward(x, weight, u0, padding=padding,
                                   dilation=dilation)
    assert out.shape == (N, Cout, H, W)
    # bf16 MXU operands carry ~2^-9 relative rounding on inputs/weights; the f32
    # reference therefore needs a looser tolerance than the old all-f32 path.
    assert jnp.allclose(out, ref, atol=2e-2, rtol=2e-2)
    assert jnp.allclose(u_new, u_ref, atol=1e-6)

    print("KERNEL_OK")
</pallas_src>

<mosaic_0001>
module attributes {stable_mosaic.version = 11 : i64} {
  func.func @_aspp_kernel(%arg0: i32, %arg1: memref<1x4x256xf32, #tpu.memory_space<vmem>>, %arg2: memref<9x8x4xbf16, #tpu.memory_space<vmem>>, %arg3: memref<1x8x16x16xf32, #tpu.memory_space<vmem>>, %arg4: memref<4x480xbf16, #tpu.memory_space<vmem>>, %arg5: memref<8x384xf32, #tpu.memory_space<vmem>>) attributes {dimension_semantics = [#tpu.dimension_semantics<parallel>], iteration_bounds = array<i64: 2>, scalar_prefetch = 0 : i64, scratch_operands = 2 : i64, tpu.core_type = #tpu.core_type<tc>, window_params = [{transform_indices = @transform_0, window_bounds = array<i64: 1, 4, 256>}, {pipeline_mode = #tpu.pipeline_mode<synchronous>, transform_indices = @transform_1, window_bounds = array<i64: 9, 8, 4>}, {transform_indices = @transform_2, window_bounds = array<i64: 1, 8, 16, 16>}]} {
    %cst = arith.constant 0.000000e+00 : bf16
    %0 = vector.broadcast %cst : bf16 to vector<4x480xbf16>
    %c0 = arith.constant 0 : index
    %c0_0 = arith.constant 0 : index
    %1 = vector.load %arg4[%c0, %c0_0] : memref<4x480xbf16, #tpu.memory_space<vmem>>, vector<4x480xbf16>
    tpu.vector_store %arg4[%c0, %c0_0], %0 {strides = array<i32>} : memref<4x480xbf16, #tpu.memory_space<vmem>>, vector<4x480xbf16>,
    %c0_1 = arith.constant 0 : index
    %c0_2 = arith.constant 0 : index
    %c0_3 = arith.constant 0 : index
    %2 = vector.load %arg1[%c0_1, %c0_2, %c0_3] : memref<1x4x256xf32, #tpu.memory_space<vmem>>, vector<1x4x16xf32>
    %3 = vector.shape_cast %2 : vector<1x4x16xf32> to vector<4x16xf32>
    %4 = arith.truncf %3 : vector<4x16xf32> to vector<4x16xbf16>
    %c0_4 = arith.constant 0 : index
    %c42 = arith.constant 42 : index
    %5 = vector.load %arg4[%c0_4, %c42] : memref<4x480xbf16, #tpu.memory_space<vmem>>, vector<4x16xbf16>
    tpu.vector_store %arg4[%c0_4, %c42], %4 {strides = array<i32>} : memref<4x480xbf16, #tpu.memory_space<vmem>>, vector<4x16xbf16>,
    %c0_5 = arith.constant 0 : index
    %c0_6 = arith.constant 0 : index
    %c16 = arith.constant 16 : index
    %6 = vector.load %arg1[%c0_5, %c0_6, %c16] : memref<1x4x256xf32, #tpu.memory_space<vmem>>, vector<1x4x16xf32>
    %7 = vector.shape_cast %6 : vector<1x4x16xf32> to vector<4x16xf32>
    %8 = arith.truncf %7 : vector<4x16xf32> to vector<4x16xbf16>
    %c0_7 = arith.constant 0 : index
    %c62 = arith.constant 62 : index
    %9 = vector.load %arg4[%c0_7, %c62] : memref<4x480xbf16, #tpu.memory_space<vmem>>, vector<4x16xbf16>
    tpu.vector_store %arg4[%c0_7, %c62], %8 {strides = array<i32>} : memref<4x480xbf16, #tpu.memory_space<vmem>>, vector<4x16xbf16>,
    %c0_8 = arith.constant 0 : index
    %c0_9 = arith.constant 0 : index
    %c32 = arith.constant 32 : index
    %10 = vector.load %arg1[%c0_8, %c0_9, %c32] : memref<1x4x256xf32, #tpu.memory_space<vmem>>, vector<1x4x16xf32>
    %11 = vector.shape_cast %10 : vector<1x4x16xf32> to vector<4x16xf32>
    %12 = arith.truncf %11 : vector<4x16xf32> to vector<4x16xbf16>
    %c0_10 = arith.constant 0 : index
    %c82 = arith.constant 82 : index
    %13 = vector.load %arg4[%c0_10, %c82] : memref<4x480xbf16, #tpu.memory_space<vmem>>, vector<4x16xbf16>
    tpu.vector_store %arg4[%c0_10, %c82], %12 {strides = array<i32>} : memref<4x480xbf16, #tpu.memory_space<vmem>>, vector<4x16xbf16>,
    %c0_11 = arith.constant 0 : index
    %c0_12 = arith.constant 0 : index
    %c48 = arith.constant 48 : index
    %14 = vector.load %arg1[%c0_11, %c0_12, %c48] : memref<1x4x256xf32, #tpu.memory_space<vmem>>, vector<1x4x16xf32>
    %15 = vector.shape_cast %14 : vector<1x4x16xf32> to vector<4x16xf32>
    %16 = arith.truncf %15 : vector<4x16xf32> to vector<4x16xbf16>
    %c0_13 = arith.constant 0 : index
    %c102 = arith.constant 102 : index
    %17 = vector.load %arg4[%c0_13, %c102] : memref<4x480xbf16, #tpu.memory_space<vmem>>, vector<4x16xbf16>
    tpu.vector_store %arg4[%c0_13, %c102], %16 {strides = array<i32>} : memref<4x480xbf16, #tpu.memory_space<vmem>>, vector<4x16xbf16>,
    %c0_14 = arith.constant 0 : index
    %c0_15 = arith.constant 0 : index
    %c64 = arith.constant 64 : index
    %18 = vector.load %arg1[%c0_14, %c0_15, %c64] : memref<1x4x256xf32, #tpu.memory_space<vmem>>, vector<1x4x16xf32>
    %19 = vector.shape_cast %18 : vector<1x4x16xf32> to vector<4x16xf32>
    %20 = arith.truncf %19 : vector<4x16xf32> to vector<4x16xbf16>
    %c0_16 = arith.constant 0 : index
    %c122 = arith.constant 122 : index
    %21 = vector.load %arg4[%c0_16, %c122] : memref<4x480xbf16, #tpu.memory_space<vmem>>, vector<4x16xbf16>
    tpu.vector_store %arg4[%c0_16, %c122], %20 {strides = array<i32>} : memref<4x480xbf16, #tpu.memory_space<vmem>>, vector<4x16xbf16>,
    %c0_17 = arith.constant 0 : index
    %c0_18 = arith.constant 0 : index
    %c80 = arith.constant 80 : index
    %22 = vector.load %arg1[%c0_17, %c0_18, %c80] : memref<1x4x256xf32, #tpu.memory_space<vmem>>, vector<1x4x16xf32>
    %23 = vector.shape_cast %22 : vector<1x4x16xf32> to vector<4x16xf32>
    %24 = arith.truncf %23 : vector<4x16xf32> to vector<4x16xbf16>
    %c0_19 = arith.constant 0 : index
    %c142 = arith.constant 142 : index
    %25 = vector.load %arg4[%c0_19, %c142] : memref<4x480xbf16, #tpu.memory_space<vmem>>, vector<4x16xbf16>
    tpu.vector_store %arg4[%c0_19, %c142], %24 {strides = array<i32>} : memref<4x480xbf16, #tpu.memory_space<vmem>>, vector<4x16xbf16>,
    %c0_20 = arith.constant 0 : index
    %c0_21 = arith.constant 0 : index
    %c96 = arith.constant 96 : index
    %26 = vector.load %arg1[%c0_20, %c0_21, %c96] : memref<1x4x256xf32, #tpu.memory_space<vmem>>, vector<1x4x16xf32>
    %27 = vector.shape_cast %26 : vector<1x4x16xf32> to vector<4x16xf32>
    %28 = arith.truncf %27 : vector<4x16xf32> to vector<4x16xbf16>
    %c0_22 = arith.constant 0 : index
    %c162 = arith.constant 162 : index
    %29 = vector.load %arg4[%c0_22, %c162] : memref<4x480xbf16, #tpu.memory_space<vmem>>, vector<4x16xbf16>
    tpu.vector_store %arg4[%c0_22, %c162], %28 {strides = array<i32>} : memref<4x480xbf16, #tpu.memory_space<vmem>>, vector<4x16xbf16>,
    %c0_23 = arith.constant 0 : index
    %c0_24 = arith.constant 0 : index
    %c112 = arith.constant 112 : index
    %30 = vector.load %arg1[%c0_23, %c0_24, %c112] : memref<1x4x256xf32, #tpu.memory_space<vmem>>, vector<1x4x16xf32>
    %31 = vector.shape_cast %30 : vector<1x4x16xf32> to vector<4x16xf32>
    %32 = arith.truncf %31 : vector<4x16xf32> to vector<4x16xbf16>
    %c0_25 = arith.constant 0 : index
    %c182 = arith.constant 182 : index
    %33 = vector.load %arg4[%c0_25, %c182] : memref<4x480xbf16, #tpu.memory_space<vmem>>, vector<4x16xbf16>
    tpu.vector_store %arg4[%c0_25, %c182], %32 {strides = array<i32>} : memref<4x480xbf16, #tpu.memory_space<vmem>>, vector<4x16xbf16>,
    %c0_26 = arith.constant 0 : index
    %c0_27 = arith.constant 0 : index
    %c128 = arith.constant 128 : index
    %34 = vector.load %arg1[%c0_26, %c0_27, %c128] : memref<1x4x256xf32, #tpu.memory_space<vmem>>, vector<1x4x16xf32>
    %35 = vector.shape_cast %34 : vector<1x4x16xf32> to vector<4x16xf32>
    %36 = arith.truncf %35 : vector<4x16xf32> to vector<4x16xbf16>
    %c0_28 = arith.constant 0 : index
    %c202 = arith.constant 202 : index
    %37 = vector.load %arg4[%c0_28, %c202] : memref<4x480xbf16, #tpu.memory_space<vmem>>, vector<4x16xbf16>
    tpu.vector_store %arg4[%c0_28, %c202], %36 {strides = array<i32>} : memref<4x480xbf16, #tpu.memory_space<vmem>>, vector<4x16xbf16>,
    %c0_29 = arith.constant 0 : index
    %c0_30 = arith.constant 0 : index
    %c144 = arith.constant 144 : index
    %38 = vector.load %arg1[%c0_29, %c0_30, %c144] : memref<1x4x256xf32, #tpu.memory_space<vmem>>, vector<1x4x16xf32>
    %39 = vector.shape_cast %38 : vector<1x4x16xf32> to vector<4x16xf32>
    %40 = arith.truncf %39 : vector<4x16xf32> to vector<4x16xbf16>
    %c0_31 = arith.constant 0 : index
    %c222 = arith.constant 222 : index
    %41 = vector.load %arg4[%c0_31, %c222] : memref<4x480xbf16, #tpu.memory_space<vmem>>, vector<4x16xbf16>
    tpu.vector_store %arg4[%c0_31, %c222], %40 {strides = array<i32>} : memref<4x480xbf16, #tpu.memory_space<vmem>>, vector<4x16xbf16>,
    %c0_32 = arith.constant 0 : index
    %c0_33 = arith.constant 0 : index
    %c160 = arith.constant 160 : index
    %42 = vector.load %arg1[%c0_32, %c0_33, %c160] : memref<1x4x256xf32, #tpu.memory_space<vmem>>, vector<1x4x16xf32>
    %43 = vector.shape_cast %42 : vector<1x4x16xf32> to vector<4x16xf32>
    %44 = arith.truncf %43 : vector<4x16xf32> to vector<4x16xbf16>
    %c0_34 = arith.constant 0 : index
    %c242 = arith.constant 242 : index
    %45 = vector.load %arg4[%c0_34, %c242] : memref<4x480xbf16, #tpu.memory_space<vmem>>, vector<4x16xbf16>
    tpu.vector_store %arg4[%c0_34, %c242], %44 {strides = array<i32>} : memref<4x480xbf16, #tpu.memory_space<vmem>>, vector<4x16xbf16>,
    %c0_35 = arith.constant 0 : index
    %c0_36 = arith.constant 0 : index
    %c176 = arith.constant 176 : index
    %46 = vector.load %arg1[%c0_35, %c0_36, %c176] : memref<1x4x256xf32, #tpu.memory_space<vmem>>, vector<1x4x16xf32>
    %47 = vector.shape_cast %46 : vector<1x4x16xf32> to vector<4x16xf32>
    %48 = arith.truncf %47 : vector<4x16xf32> to vector<4x16xbf16>
    %c0_37 = arith.constant 0 : index
    %c262 = arith.constant 262 : index
    %49 = vector.load %arg4[%c0_37, %c262] : memref<4x480xbf16, #tpu.memory_space<vmem>>, vector<4x16xbf16>
    tpu.vector_store %arg4[%c0_37, %c262], %48 {strides = array<i32>} : memref<4x480xbf16, #tpu.memory_space<vmem>>, vector<4x16xbf16>,
    %c0_38 = arith.constant 0 : index
    %c0_39 = arith.constant 0 : index
    %c192 = arith.constant 192 : index
    %50 = vector.load %arg1[%c0_38, %c0_39, %c192] : memref<1x4x256xf32, #tpu.memory_space<vmem>>, vector<1x4x16xf32>
    %51 = vector.shape_cast %50 : vector<1x4x16xf32> to vector<4x16xf32>
    %52 = arith.truncf %51 : vector<4x16xf32> to vector<4x16xbf16>
    %c0_40 = arith.constant 0 : index
    %c282 = arith.constant 282 : index
    %53 = vector.load %arg4[%c0_40, %c282] : memref<4x480xbf16, #tpu.memory_space<vmem>>, vector<4x16xbf16>
    tpu.vector_store %arg4[%c0_40, %c282], %52 {strides = array<i32>} : memref<4x480xbf16, #tpu.memory_space<vmem>>, vector<4x16xbf16>,
    %c0_41 = arith.constant 0 : index
    %c0_42 = arith.constant 0 : index
    %c208 = arith.constant 208 : index
    %54 = vector.load %arg1[%c0_41, %c0_42, %c208] : memref<1x4x256xf32, #tpu.memory_space<vmem>>, vector<1x4x16xf32>
    %55 = vector.shape_cast %54 : vector<1x4x16xf32> to vector<4x16xf32>
    %56 = arith.truncf %55 : vector<4x16xf32> to vector<4x16xbf16>
    %c0_43 = arith.constant 0 : index
    %c302 = arith.constant 302 : index
    %57 = vector.load %arg4[%c0_43, %c302] : memref<4x480xbf16, #tpu.memory_space<vmem>>, vector<4x16xbf16>
    tpu.vector_store %arg4[%c0_43, %c302], %56 {strides = array<i32>} : memref<4x480xbf16, #tpu.memory_space<vmem>>, vector<4x16xbf16>,
    %c0_44 = arith.constant 0 : index
    %c0_45 = arith.constant 0 : index
    %c224 = arith.constant 224 : index
    %58 = vector.load %arg1[%c0_44, %c0_45, %c224] : memref<1x4x256xf32, #tpu.memory_space<vmem>>, vector<1x4x16xf32>
    %59 = vector.shape_cast %58 : vector<1x4x16xf32> to vector<4x16xf32>
    %60 = arith.truncf %59 : vector<4x16xf32> to vector<4x16xbf16>
    %c0_46 = arith.constant 0 : index
    %c322 = arith.constant 322 : index
    %61 = vector.load %arg4[%c0_46, %c322] : memref<4x480xbf16, #tpu.memory_space<vmem>>, vector<4x16xbf16>
    tpu.vector_store %arg4[%c0_46, %c322], %60 {strides = array<i32>} : memref<4x480xbf16, #tpu.memory_space<vmem>>, vector<4x16xbf16>,
    %c0_47 = arith.constant 0 : index
    %c0_48 = arith.constant 0 : index
    %c240 = arith.constant 240 : index
    %62 = vector.load %arg1[%c0_47, %c0_48, %c240] : memref<1x4x256xf32, #tpu.memory_space<vmem>>, vector<1x4x16xf32>
    %63 = vector.shape_cast %62 : vector<1x4x16xf32> to vector<4x16xf32>
    %64 = arith.truncf %63 : vector<4x16xf32> to vector<4x16xbf16>
    %c0_49 = arith.constant 0 : index
    %c342 = arith.constant 342 : index
    %65 = vector.load %arg4[%c0_49, %c342] : memref<4x480xbf16, #tpu.memory_space<vmem>>, vector<4x16xbf16>
    tpu.vector_store %arg4[%c0_49, %c342], %64 {strides = array<i32>} : memref<4x480xbf16, #tpu.memory_space<vmem>>, vector<4x16xbf16>,
    %cst_50 = arith.constant 0.000000e+00 : f32
    %66 = vector.broadcast %cst_50 : f32 to vector<8x384xf32>
    %c0_51 = arith.constant 0 : index
    %c0_52 = arith.constant 0 : index
    %c0_53 = arith.constant 0 : index
    %67 = vector.load %arg2[%c0_51, %c0_52, %c0_53] : memref<9x8x4xbf16, #tpu.memory_space<vmem>>, vector<1x8x4xbf16>
    %68 = vector.shape_cast %67 : vector<1x8x4xbf16> to vector<8x4xbf16>
    %c0_54 = arith.constant 0 : index
    %c0_55 = arith.constant 0 : index
    %69 = vector.load %arg4[%c0_54, %c0_55] : memref<4x480xbf16, #tpu.memory_space<vmem>>, vector<4x384xbf16>
    %cst_56 = arith.constant dense<0.000000e+00> : vector<8x384xf32>
    %70 = tpu.matmul %68, %69, %cst_56 {dimension_numbers = #tpu.dot_dimension_numbers<[1], [0], [0], [1], [0, 0, 1, 1], [], []>} : vector<8x4xbf16>, vector<4x384xbf16>, vector<8x384xf32> -> vector<8x384xf32>
    %71 = arith.addf %66, %70 : vector<8x384xf32>
    %c1 = arith.constant 1 : index
    %c0_57 = arith.constant 0 : index
    %c0_58 = arith.constant 0 : index
    %72 = vector.load %arg2[%c1, %c0_57, %c0_58] : memref<9x8x4xbf16, #tpu.memory_space<vmem>>, vector<1x8x4xbf16>
    %73 = vector.shape_cast %72 : vector<1x8x4xbf16> to vector<8x4xbf16>
    %c0_59 = arith.constant 0 : index
    %c2 = arith.constant 2 : index
    %74 = vector.load %arg4[%c0_59, %c2] : memref<4x480xbf16, #tpu.memory_space<vmem>>, vector<4x384xbf16>
    %cst_60 = arith.constant dense<0.000000e+00> : vector<8x384xf32>
    %75 = tpu.matmul %73, %74, %cst_60 {dimension_numbers = #tpu.dot_dimension_numbers<[1], [0], [0], [1], [0, 0, 1, 1], [], []>} : vector<8x4xbf16>, vector<4x384xbf16>, vector<8x384xf32> -> vector<8x384xf32>
    %76 = arith.addf %71, %75 : vector<8x384xf32>
    %c2_61 = arith.constant 2 : index
    %c0_62 = arith.constant 0 : index
    %c0_63 = arith.constant 0 : index
    %77 = vector.load %arg2[%c2_61, %c0_62, %c0_63] : memref<9x8x4xbf16, #tpu.memory_space<vmem>>, vector<1x8x4xbf16>
    %78 = vector.shape_cast %77 : vector<1x8x4xbf16> to vector<8x4xbf16>
    %c0_64 = arith.constant 0 : index
    %c4 = arith.constant 4 : index
    %79 = vector.load %arg4[%c0_64, %c4] : memref<4x480xbf16, #tpu.memory_space<vmem>>, vector<4x384xbf16>
    %cst_65 = arith.constant dense<0.000000e+00> : vector<8x384xf32>
    %80 = tpu.matmul %78, %79, %cst_65 {dimension_numbers = #tpu.dot_dimension_numbers<[1], [0], [0], [1], [0, 0, 1, 1], [], []>} : vector<8x4xbf16>, vector<4x384xbf16>, vector<8x384xf32> -> vector<8x384xf32>
    %81 = arith.addf %76, %80 : vector<8x384xf32>
    %c3 = arith.constant 3 : index
    %c0_66 = arith.constant 0 : index
    %c0_67 = arith.constant 0 : index
    %82 = vector.load %arg2[%c3, %c0_66, %c0_67] : memref<9x8x4xbf16, #tpu.memory_space<vmem>>, vector<1x8x4xbf16>
    %83 = vector.shape_cast %82 : vector<1x8x4xbf16> to vector<8x4xbf16>
    %c0_68 = arith.constant 0 : index
    %c40 = arith.constant 40 : index
    %84 = vector.load %arg4[%c0_68, %c40] : memref<4x480xbf16, #tpu.memory_space<vmem>>, vector<4x384xbf16>
    %cst_69 = arith.constant dense<0.000000e+00> : vector<8x384xf32>
    %85 = tpu.matmul %83, %84, %cst_69 {dimension_numbers = #tpu.dot_dimension_numbers<[1], [0], [0], [1], [0, 0, 1, 1], [], []>} : vector<8x4xbf16>, vector<4x384xbf16>, vector<8x384xf32> -> vector<8x384xf32>
    %86 = arith.addf %81, %85 : vector<8x384xf32>
    %c4_70 = arith.constant 4 : index
    %c0_71 = arith.constant 0 : index
    %c0_72 = arith.constant 0 : index
    %87 = vector.load %arg2[%c4_70, %c0_71, %c0_72] : memref<9x8x4xbf16, #tpu.memory_space<vmem>>, vector<1x8x4xbf16>
    %88 = vector.shape_cast %87 : vector<1x8x4xbf16> to vector<8x4xbf16>
    %c0_73 = arith.constant 0 : index
    %c42_74 = arith.constant 42 : index
    %89 = vector.load %arg4[%c0_73, %c42_74] : memref<4x480xbf16, #tpu.memory_space<vmem>>, vector<4x384xbf16>
    %cst_75 = arith.constant dense<0.000000e+00> : vector<8x384xf32>
    %90 = tpu.matmul %88, %89, %cst_75 {dimension_numbers = #tpu.dot_dimension_numbers<[1], [0], [0], [1], [0, 0, 1, 1], [], []>} : vector<8x4xbf16>, vector<4x384xbf16>, vector<8x384xf32> -> vector<8x384xf32>
    %91 = arith.addf %86, %90 : vector<8x384xf32>
    %c5 = arith.constant 5 : index
    %c0_76 = arith.constant 0 : index
    %c0_77 = arith.constant 0 : index
    %92 = vector.load %arg2[%c5, %c0_76, %c0_77] : memref<9x8x4xbf16, #tpu.memory_space<vmem>>, vector<1x8x4xbf16>
    %93 = vector.shape_cast %92 : vector<1x8x4xbf16> to vector<8x4xbf16>
    %c0_78 = arith.constant 0 : index
    %c44 = arith.constant 44 : index
    %94 = vector.load %arg4[%c0_78, %c44] : memref<4x480xbf16, #tpu.memory_space<vmem>>, vector<4x384xbf16>
    %cst_79 = arith.constant dense<0.000000e+00> : vector<8x384xf32>
    %95 = tpu.matmul %93, %94, %cst_79 {dimension_numbers = #tpu.dot_dimension_numbers<[1], [0], [0], [1], [0, 0, 1, 1], [], []>} : vector<8x4xbf16>, vector<4x384xbf16>, vector<8x384xf32> -> vector<8x384xf32>
    %96 = arith.addf %91, %95 : vector<8x384xf32>
    %c6 = arith.constant 6 : index
    %c0_80 = arith.constant 0 : index
    %c0_81 = arith.constant 0 : index
    %97 = vector.load %arg2[%c6, %c0_80, %c0_81] : memref<9x8x4xbf16, #tpu.memory_space<vmem>>, vector<1x8x4xbf16>
    %98 = vector.shape_cast %97 : vector<1x8x4xbf16> to vector<8x4xbf16>
    %c0_82 = arith.constant 0 : index
    %c80_83 = arith.constant 80 : index
    %99 = vector.load %arg4[%c0_82, %c80_83] : memref<4x480xbf16, #tpu.memory_space<vmem>>, vector<4x384xbf16>
    %cst_84 = arith.constant dense<0.000000e+00> : vector<8x384xf32>
    %100 = tpu.matmul %98, %99, %cst_84 {dimension_numbers = #tpu.dot_dimension_numbers<[1], [0], [0], [1], [0, 0, 1, 1], [], []>} : vector<8x4xbf16>, vector<4x384xbf16>, vector<8x384xf32> -> vector<8x384xf32>
    %101 = arith.addf %96, %100 : vector<8x384xf32>
    %c7 = arith.constant 7 : index
    %c0_85 = arith.constant 0 : index
    %c0_86 = arith.constant 0 : index
    %102 = vector.load %arg2[%c7, %c0_85, %c0_86] : memref<9x8x4xbf16, #tpu.memory_space<vmem>>, vector<1x8x4xbf16>
    %103 = vector.shape_cast %102 : vector<1x8x4xbf16> to vector<8x4xbf16>
    %c0_87 = arith.constant 0 : index
    %c82_88 = arith.constant 82 : index
    %104 = vector.load %arg4[%c0_87, %c82_88] : memref<4x480xbf16, #tpu.memory_space<vmem>>, vector<4x384xbf16>
    %cst_89 = arith.constant dense<0.000000e+00> : vector<8x384xf32>
    %105 = tpu.matmul %103, %104, %cst_89 {dimension_numbers = #tpu.dot_dimension_numbers<[1], [0], [0], [1], [0, 0, 1, 1], [], []>} : vector<8x4xbf16>, vector<4x384xbf16>, vector<8x384xf32> -> vector<8x384xf32>
    %106 = arith.addf %101, %105 : vector<8x384xf32>
    %c8 = arith.constant 8 : index
    %c0_90 = arith.constant 0 : index
    %c0_91 = arith.constant 0 : index
    %107 = vector.load %arg2[%c8, %c0_90, %c0_91] : memref<9x8x4xbf16, #tpu.memory_space<vmem>>, vector<1x8x4xbf16>
    %108 = vector.shape_cast %107 : vector<1x8x4xbf16> to vector<8x4xbf16>
    %c0_92 = arith.constant 0 : index
    %c84 = arith.constant 84 : index
    %109 = vector.load %arg4[%c0_92, %c84] : memref<4x480xbf16, #tpu.memory_space<vmem>>, vector<4x384xbf16>
    %cst_93 = arith.constant dense<0.000000e+00> : vector<8x384xf32>
    %110 = tpu.matmul %108, %109, %cst_93 {dimension_numbers = #tpu.dot_dimension_numbers<[1], [0], [0], [1], [0, 0, 1, 1], [], []>} : vector<8x4xbf16>, vector<4x384xbf16>, vector<8x384xf32> -> vector<8x384xf32>
    %111 = arith.addf %106, %110 : vector<8x384xf32>
    %c0_94 = arith.constant 0 : index
    %c0_95 = arith.constant 0 : index
    %112 = vector.load %arg5[%c0_94, %c0_95] : memref<8x384xf32, #tpu.memory_space<vmem>>, vector<8x384xf32>
    tpu.vector_store %arg5[%c0_94, %c0_95], %111 {strides = array<i32>} : memref<8x384xf32, #tpu.memory_space<vmem>>, vector<8x384xf32>,
    %c0_96 = arith.constant 0 : index
    %c0_97 = arith.constant 0 : index
    %113 = vector.load %arg5[%c0_96, %c0_97] : memref<8x384xf32, #tpu.memory_space<vmem>>, vector<8x16xf32>
    %cst_98 = arith.constant 0.000000e+00 : f32
    %114 = vector.broadcast %cst_98 : f32 to vector<8x16xf32>
    %115 = arith.cmpf ogt, %113, %114 : vector<8x16xf32>
    %cst_99 = arith.constant 2.000000e-01 : f32
    %116 = vector.broadcast %cst_99 : f32 to vector<8x16xf32>
    %117 = arith.mulf %116, %113 : vector<8x16xf32>
    %118 = arith.select %115, %113, %117 : vector<8x16xi1>, vector<8x16xf32>
    %c0_100 = arith.constant 0 : index
    %c0_101 = arith.constant 0 : index
    %c0_102 = arith.constant 0 : index
    %c0_103 = arith.constant 0 : index
    %119 = vector.load %arg3[%c0_100, %c0_101, %c0_102, %c0_103] : memref<1x8x16x16xf32, #tpu.memory_space<vmem>>, vector<1x8x1x16xf32>
    %120 = vector.shape_cast %119 : vector<1x8x1x16xf32> to vector<8x16xf32>
    %121 = vector.shape_cast %118 : vector<8x16xf32> to vector<1x8x1x16xf32>
    tpu.vector_store %arg3[%c0_100, %c0_101, %c0_102, %c0_103], %121 {strides = array<i32>} : memref<1x8x16x16xf32, #tpu.memory_space<vmem>>, vector<1x8x1x16xf32>,
    %c0_104 = arith.constant 0 : index
    %c20 = arith.constant 20 : index
    %122 = vector.load %arg5[%c0_104, %c20] : memref<8x384xf32, #tpu.memory_space<vmem>>, vector<8x16xf32>
    %cst_105 = arith.constant 0.000000e+00 : f32
    %123 = vector.broadcast %cst_105 : f32 to vector<8x16xf32>
    %124 = arith.cmpf ogt, %122, %123 : vector<8x16xf32>
    %cst_106 = arith.constant 2.000000e-01 : f32
    %125 = vector.broadcast %cst_106 : f32 to vector<8x16xf32>
    %126 = arith.mulf %125, %122 : vector<8x16xf32>
    %127 = arith.select %124, %122, %126 : vector<8x16xi1>, vector<8x16xf32>
    %c0_107 = arith.constant 0 : index
    %c0_108 = arith.constant 0 : index
    %c1_109 = arith.constant 1 : index
    %c0_110 = arith.constant 0 : index
    %128 = vector.load %arg3[%c0_107, %c0_108, %c1_109, %c0_110] : memref<1x8x16x16xf32, #tpu.memory_space<vmem>>, vector<1x8x1x16xf32>
    %129 = vector.shape_cast %128 : vector<1x8x1x16xf32> to vector<8x16xf32>
    %130 = vector.shape_cast %127 : vector<8x16xf32> to vector<1x8x1x16xf32>
    tpu.vector_store %arg3[%c0_107, %c0_108, %c1_109, %c0_110], %130 {strides = array<i32>} : memref<1x8x16x16xf32, #tpu.memory_space<vmem>>, vector<1x8x1x16xf32>,
    %c0_111 = arith.constant 0 : index
    %c40_112 = arith.constant 40 : index
    %131 = vector.load %arg5[%c0_111, %c40_112] : memref<8x384xf32, #tpu.memory_space<vmem>>, vector<8x16xf32>
    %cst_113 = arith.constant 0.000000e+00 : f32
    %132 = vector.broadcast %cst_113 : f32 to vector<8x16xf32>
    %133 = arith.cmpf ogt, %131, %132 : vector<8x16xf32>
    %cst_114 = arith.constant 2.000000e-01 : f32
    %134 = vector.broadcast %cst_114 : f32 to vector<8x16xf32>
    %135 = arith.mulf %134, %131 : vector<8x16xf32>
    %136 = arith.select %133, %131, %135 : vector<8x16xi1>, vector<8x16xf32>
    %c0_115 = arith.constant 0 : index
    %c0_116 = arith.constant 0 : index
    %c2_117 = arith.constant 2 : index
    %c0_118 = arith.constant 0 : index
    %137 = vector.load %arg3[%c0_115, %c0_116, %c2_117, %c0_118] : memref<1x8x16x16xf32, #tpu.memory_space<vmem>>, vector<1x8x1x16xf32>
    %138 = vector.shape_cast %137 : vector<1x8x1x16xf32> to vector<8x16xf32>
    %139 = vector.shape_cast %136 : vector<8x16xf32> to vector<1x8x1x16xf32>
    tpu.vector_store %arg3[%c0_115, %c0_116, %c2_117, %c0_118], %139 {strides = array<i32>} : memref<1x8x16x16xf32, #tpu.memory_space<vmem>>, vector<1x8x1x16xf32>,
    %c0_119 = arith.constant 0 : index
    %c60 = arith.constant 60 : index
    %140 = vector.load %arg5[%c0_119, %c60] : memref<8x384xf32, #tpu.memory_space<vmem>>, vector<8x16xf32>
    %cst_120 = arith.constant 0.000000e+00 : f32
    %141 = vector.broadcast %cst_120 : f32 to vector<8x16xf32>
    %142 = arith.cmpf ogt, %140, %141 : vector<8x16xf32>
    %cst_121 = arith.constant 2.000000e-01 : f32
    %143 = vector.broadcast %cst_121 : f32 to vector<8x16xf32>
    %144 = arith.mulf %143, %140 : vector<8x16xf32>
    %145 = arith.select %142, %140, %144 : vector<8x16xi1>, vector<8x16xf32>
    %c0_122 = arith.constant 0 : index
    %c0_123 = arith.constant 0 : index
    %c3_124 = arith.constant 3 : index
    %c0_125 = arith.constant 0 : index
    %146 = vector.load %arg3[%c0_122, %c0_123, %c3_124, %c0_125] : memref<1x8x16x16xf32, #tpu.memory_space<vmem>>, vector<1x8x1x16xf32>
    %147 = vector.shape_cast %146 : vector<1x8x1x16xf32> to vector<8x16xf32>
    %148 = vector.shape_cast %145 : vector<8x16xf32> to vector<1x8x1x16xf32>
    tpu.vector_store %arg3[%c0_122, %c0_123, %c3_124, %c0_125], %148 {strides = array<i32>} : memref<1x8x16x16xf32, #tpu.memory_space<vmem>>, vector<1x8x1x16xf32>,
    %c0_126 = arith.constant 0 : index
    %c80_127 = arith.constant 80 : index
    %149 = vector.load %arg5[%c0_126, %c80_127] : memref<8x384xf32, #tpu.memory_space<vmem>>, vector<8x16xf32>
    %cst_128 = arith.constant 0.000000e+00 : f32
    %150 = vector.broadcast %cst_128 : f32 to vector<8x16xf32>
    %151 = arith.cmpf ogt, %149, %150 : vector<8x16xf32>
    %cst_129 = arith.constant 2.000000e-01 : f32
    %152 = vector.broadcast %cst_129 : f32 to vector<8x16xf32>
    %153 = arith.mulf %152, %149 : vector<8x16xf32>
    %154 = arith.select %151, %149, %153 : vector<8x16xi1>, vector<8x16xf32>
    %c0_130 = arith.constant 0 : index
    %c0_131 = arith.constant 0 : index
    %c4_132 = arith.constant 4 : index
    %c0_133 = arith.constant 0 : index
    %155 = vector.load %arg3[%c0_130, %c0_131, %c4_132, %c0_133] : memref<1x8x16x16xf32, #tpu.memory_space<vmem>>, vector<1x8x1x16xf32>
    %156 = vector.shape_cast %155 : vector<1x8x1x16xf32> to vector<8x16xf32>
    %157 = vector.shape_cast %154 : vector<8x16xf32> to vector<1x8x1x16xf32>
    tpu.vector_store %arg3[%c0_130, %c0_131, %c4_132, %c0_133], %157 {strides = array<i32>} : memref<1x8x16x16xf32, #tpu.memory_space<vmem>>, vector<1x8x1x16xf32>,
    %c0_134 = arith.constant 0 : index
    %c100 = arith.constant 100 : index
    %158 = vector.load %arg5[%c0_134, %c100] : memref<8x384xf32, #tpu.memory_space<vmem>>, vector<8x16xf32>
    %cst_135 = arith.constant 0.000000e+00 : f32
    %159 = vector.broadcast %cst_135 : f32 to vector<8x16xf32>
    %160 = arith.cmpf ogt, %158, %159 : vector<8x16xf32>
    %cst_136 = arith.constant 2.000000e-01 : f32
    %161 = vector.broadcast %cst_136 : f32 to vector<8x16xf32>
    %162 = arith.mulf %161, %158 : vector<8x16xf32>
    %163 = arith.select %160, %158, %162 : vector<8x16xi1>, vector<8x16xf32>
    %c0_137 = arith.constant 0 : index
    %c0_138 = arith.constant 0 : index
    %c5_139 = arith.constant 5 : index
    %c0_140 = arith.constant 0 : index
    %164 = vector.load %arg3[%c0_137, %c0_138, %c5_139, %c0_140] : memref<1x8x16x16xf32, #tpu.memory_space<vmem>>, vector<1x8x1x16xf32>
    %165 = vector.shape_cast %164 : vector<1x8x1x16xf32> to vector<8x16xf32>
    %166 = vector.shape_cast %163 : vector<8x16xf32> to vector<1x8x1x16xf32>
    tpu.vector_store %arg3[%c0_137, %c0_138, %c5_139, %c0_140], %166 {strides = array<i32>} : memref<1x8x16x16xf32, #tpu.memory_space<vmem>>, vector<1x8x1x16xf32>,
    %c0_141 = arith.constant 0 : index
    %c120 = arith.constant 120 : index
    %167 = vector.load %arg5[%c0_141, %c120] : memref<8x384xf32, #tpu.memory_space<vmem>>, vector<8x16xf32>
    %cst_142 = arith.constant 0.000000e+00 : f32
    %168 = vector.broadcast %cst_142 : f32 to vector<8x16xf32>
    %169 = arith.cmpf ogt, %167, %168 : vector<8x16xf32>
    %cst_143 = arith.constant 2.000000e-01 : f32
    %170 = vector.broadcast %cst_143 : f32 to vector<8x16xf32>
    %171 = arith.mulf %170, %167 : vector<8x16xf32>
    %172 = arith.select %169, %167, %171 : vector<8x16xi1>, vector<8x16xf32>
    %c0_144 = arith.constant 0 : index
    %c0_145 = arith.constant 0 : index
    %c6_146 = arith.constant 6 : index
    %c0_147 = arith.constant 0 : index
    %173 = vector.load %arg3[%c0_144, %c0_145, %c6_146, %c0_147] : memref<1x8x16x16xf32, #tpu.memory_space<vmem>>, vector<1x8x1x16xf32>
    %174 = vector.shape_cast %173 : vector<1x8x1x16xf32> to vector<8x16xf32>
    %175 = vector.shape_cast %172 : vector<8x16xf32> to vector<1x8x1x16xf32>
    tpu.vector_store %arg3[%c0_144, %c0_145, %c6_146, %c0_147], %175 {strides = array<i32>} : memref<1x8x16x16xf32, #tpu.memory_space<vmem>>, vector<1x8x1x16xf32>,
    %c0_148 = arith.constant 0 : index
    %c140 = arith.constant 140 : index
    %176 = vector.load %arg5[%c0_148, %c140] : memref<8x384xf32, #tpu.memory_space<vmem>>, vector<8x16xf32>
    %cst_149 = arith.constant 0.000000e+00 : f32
    %177 = vector.broadcast %cst_149 : f32 to vector<8x16xf32>
    %178 = arith.cmpf ogt, %176, %177 : vector<8x16xf32>
    %cst_150 = arith.constant 2.000000e-01 : f32
    %179 = vector.broadcast %cst_150 : f32 to vector<8x16xf32>
    %180 = arith.mulf %179, %176 : vector<8x16xf32>
    %181 = arith.select %178, %176, %180 : vector<8x16xi1>, vector<8x16xf32>
    %c0_151 = arith.constant 0 : index
    %c0_152 = arith.constant 0 : index
    %c7_153 = arith.constant 7 : index
    %c0_154 = arith.constant 0 : index
    %182 = vector.load %arg3[%c0_151, %c0_152, %c7_153, %c0_154] : memref<1x8x16x16xf32, #tpu.memory_space<vmem>>, vector<1x8x1x16xf32>
    %183 = vector.shape_cast %182 : vector<1x8x1x16xf32> to vector<8x16xf32>
    %184 = vector.shape_cast %181 : vector<8x16xf32> to vector<1x8x1x16xf32>
    tpu.vector_store %arg3[%c0_151, %c0_152, %c7_153, %c0_154], %184 {strides = array<i32>} : memref<1x8x16x16xf32, #tpu.memory_space<vmem>>, vector<1x8x1x16xf32>,
    %c0_155 = arith.constant 0 : index
    %c160_156 = arith.constant 160 : index
    %185 = vector.load %arg5[%c0_155, %c160_156] : memref<8x384xf32, #tpu.memory_space<vmem>>, vector<8x16xf32>
    %cst_157 = arith.constant 0.000000e+00 : f32
    %186 = vector.broadcast %cst_157 : f32 to vector<8x16xf32>
    %187 = arith.cmpf ogt, %185, %186 : vector<8x16xf32>
    %cst_158 = arith.constant 2.000000e-01 : f32
    %188 = vector.broadcast %cst_158 : f32 to vector<8x16xf32>
    %189 = arith.mulf %188, %185 : vector<8x16xf32>
    %190 = arith.select %187, %185, %189 : vector<8x16xi1>, vector<8x16xf32>
    %c0_159 = arith.constant 0 : index
    %c0_160 = arith.constant 0 : index
    %c8_161 = arith.constant 8 : index
    %c0_162 = arith.constant 0 : index
    %191 = vector.load %arg3[%c0_159, %c0_160, %c8_161, %c0_162] : memref<1x8x16x16xf32, #tpu.memory_space<vmem>>, vector<1x8x1x16xf32>
    %192 = vector.shape_cast %191 : vector<1x8x1x16xf32> to vector<8x16xf32>
    %193 = vector.shape_cast %190 : vector<8x16xf32> to vector<1x8x1x16xf32>
    tpu.vector_store %arg3[%c0_159, %c0_160, %c8_161, %c0_162], %193 {strides = array<i32>} : memref<1x8x16x16xf32, #tpu.memory_space<vmem>>, vector<1x8x1x16xf32>,
    %c0_163 = arith.constant 0 : index
    %c180 = arith.constant 180 : index
    %194 = vector.load %arg5[%c0_163, %c180] : memref<8x384xf32, #tpu.memory_space<vmem>>, vector<8x16xf32>
    %cst_164 = arith.constant 0.000000e+00 : f32
    %195 = vector.broadcast %cst_164 : f32 to vector<8x16xf32>
    %196 = arith.cmpf ogt, %194, %195 : vector<8x16xf32>
    %cst_165 = arith.constant 2.000000e-01 : f32
    %197 = vector.broadcast %cst_165 : f32 to vector<8x16xf32>
    %198 = arith.mulf %197, %194 : vector<8x16xf32>
    %199 = arith.select %196, %194, %198 : vector<8x16xi1>, vector<8x16xf32>
    %c0_166 = arith.constant 0 : index
    %c0_167 = arith.constant 0 : index
    %c9 = arith.constant 9 : index
    %c0_168 = arith.constant 0 : index
    %200 = vector.load %arg3[%c0_166, %c0_167, %c9, %c0_168] : memref<1x8x16x16xf32, #tpu.memory_space<vmem>>, vector<1x8x1x16xf32>
    %201 = vector.shape_cast %200 : vector<1x8x1x16xf32> to vector<8x16xf32>
    %202 = vector.shape_cast %199 : vector<8x16xf32> to vector<1x8x1x16xf32>
    tpu.vector_store %arg3[%c0_166, %c0_167, %c9, %c0_168], %202 {strides = array<i32>} : memref<1x8x16x16xf32, #tpu.memory_space<vmem>>, vector<1x8x1x16xf32>,
    %c0_169 = arith.constant 0 : index
    %c200 = arith.constant 200 : index
    %203 = vector.load %arg5[%c0_169, %c200] : memref<8x384xf32, #tpu.memory_space<vmem>>, vector<8x16xf32>
    %cst_170 = arith.constant 0.000000e+00 : f32
    %204 = vector.broadcast %cst_170 : f32 to vector<8x16xf32>
    %205 = arith.cmpf ogt, %203, %204 : vector<8x16xf32>
    %cst_171 = arith.constant 2.000000e-01 : f32
    %206 = vector.broadcast %cst_171 : f32 to vector<8x16xf32>
    %207 = arith.mulf %206, %203 : vector<8x16xf32>
    %208 = arith.select %205, %203, %207 : vector<8x16xi1>, vector<8x16xf32>
    %c0_172 = arith.constant 0 : index
    %c0_173 = arith.constant 0 : index
    %c10 = arith.constant 10 : index
    %c0_174 = arith.constant 0 : index
    %209 = vector.load %arg3[%c0_172, %c0_173, %c10, %c0_174] : memref<1x8x16x16xf32, #tpu.memory_space<vmem>>, vector<1x8x1x16xf32>
    %210 = vector.shape_cast %209 : vector<1x8x1x16xf32> to vector<8x16xf32>
    %211 = vector.shape_cast %208 : vector<8x16xf32> to vector<1x8x1x16xf32>
    tpu.vector_store %arg3[%c0_172, %c0_173, %c10, %c0_174], %211 {strides = array<i32>} : memref<1x8x16x16xf32, #tpu.memory_space<vmem>>, vector<1x8x1x16xf32>,
    %c0_175 = arith.constant 0 : index
    %c220 = arith.constant 220 : index
    %212 = vector.load %arg5[%c0_175, %c220] : memref<8x384xf32, #tpu.memory_space<vmem>>, vector<8x16xf32>
    %cst_176 = arith.constant 0.000000e+00 : f32
    %213 = vector.broadcast %cst_176 : f32 to vector<8x16xf32>
    %214 = arith.cmpf ogt, %212, %213 : vector<8x16xf32>
    %cst_177 = arith.constant 2.000000e-01 : f32
    %215 = vector.broadcast %cst_177 : f32 to vector<8x16xf32>
    %216 = arith.mulf %215, %212 : vector<8x16xf32>
    %217 = arith.select %214, %212, %216 : vector<8x16xi1>, vector<8x16xf32>
    %c0_178 = arith.constant 0 : index
    %c0_179 = arith.constant 0 : index
    %c11 = arith.constant 11 : index
    %c0_180 = arith.constant 0 : index
    %218 = vector.load %arg3[%c0_178, %c0_179, %c11, %c0_180] : memref<1x8x16x16xf32, #tpu.memory_space<vmem>>, vector<1x8x1x16xf32>
    %219 = vector.shape_cast %218 : vector<1x8x1x16xf32> to vector<8x16xf32>
    %220 = vector.shape_cast %217 : vector<8x16xf32> to vector<1x8x1x16xf32>
    tpu.vector_store %arg3[%c0_178, %c0_179, %c11, %c0_180], %220 {strides = array<i32>} : memref<1x8x16x16xf32, #tpu.memory_space<vmem>>, vector<1x8x1x16xf32>,
    %c0_181 = arith.constant 0 : index
    %c240_182 = arith.constant 240 : index
    %221 = vector.load %arg5[%c0_181, %c240_182] : memref<8x384xf32, #tpu.memory_space<vmem>>, vector<8x16xf32>
    %cst_183 = arith.constant 0.000000e+00 : f32
    %222 = vector.broadcast %cst_183 : f32 to vector<8x16xf32>
    %223 = arith.cmpf ogt, %221, %222 : vector<8x16xf32>
    %cst_184 = arith.constant 2.000000e-01 : f32
    %224 = vector.broadcast %cst_184 : f32 to vector<8x16xf32>
    %225 = arith.mulf %224, %221 : vector<8x16xf32>
    %226 = arith.select %223, %221, %225 : vector<8x16xi1>, vector<8x16xf32>
    %c0_185 = arith.constant 0 : index
    %c0_186 = arith.constant 0 : index
    %c12 = arith.constant 12 : index
    %c0_187 = arith.constant 0 : index
    %227 = vector.load %arg3[%c0_185, %c0_186, %c12, %c0_187] : memref<1x8x16x16xf32, #tpu.memory_space<vmem>>, vector<1x8x1x16xf32>
    %228 = vector.shape_cast %227 : vector<1x8x1x16xf32> to vector<8x16xf32>
    %229 = vector.shape_cast %226 : vector<8x16xf32> to vector<1x8x1x16xf32>
    tpu.vector_store %arg3[%c0_185, %c0_186, %c12, %c0_187], %229 {strides = array<i32>} : memref<1x8x16x16xf32, #tpu.memory_space<vmem>>, vector<1x8x1x16xf32>,
    %c0_188 = arith.constant 0 : index
    %c260 = arith.constant 260 : index
    %230 = vector.load %arg5[%c0_188, %c260] : memref<8x384xf32, #tpu.memory_space<vmem>>, vector<8x16xf32>
    %cst_189 = arith.constant 0.000000e+00 : f32
    %231 = vector.broadcast %cst_189 : f32 to vector<8x16xf32>
    %232 = arith.cmpf ogt, %230, %231 : vector<8x16xf32>
    %cst_190 = arith.constant 2.000000e-01 : f32
    %233 = vector.broadcast %cst_190 : f32 to vector<8x16xf32>
    %234 = arith.mulf %233, %230 : vector<8x16xf32>
    %235 = arith.select %232, %230, %234 : vector<8x16xi1>, vector<8x16xf32>
    %c0_191 = arith.constant 0 : index
    %c0_192 = arith.constant 0 : index
    %c13 = arith.constant 13 : index
    %c0_193 = arith.constant 0 : index
    %236 = vector.load %arg3[%c0_191, %c0_192, %c13, %c0_193] : memref<1x8x16x16xf32, #tpu.memory_space<vmem>>, vector<1x8x1x16xf32>
    %237 = vector.shape_cast %236 : vector<1x8x1x16xf32> to vector<8x16xf32>
    %238 = vector.shape_cast %235 : vector<8x16xf32> to vector<1x8x1x16xf32>
    tpu.vector_store %arg3[%c0_191, %c0_192, %c13, %c0_193], %238 {strides = array<i32>} : memref<1x8x16x16xf32, #tpu.memory_space<vmem>>, vector<1x8x1x16xf32>,
    %c0_194 = arith.constant 0 : index
    %c280 = arith.constant 280 : index
    %239 = vector.load %arg5[%c0_194, %c280] : memref<8x384xf32, #tpu.memory_space<vmem>>, vector<8x16xf32>
    %cst_195 = arith.constant 0.000000e+00 : f32
    %240 = vector.broadcast %cst_195 : f32 to vector<8x16xf32>
    %241 = arith.cmpf ogt, %239, %240 : vector<8x16xf32>
    %cst_196 = arith.constant 2.000000e-01 : f32
    %242 = vector.broadcast %cst_196 : f32 to vector<8x16xf32>
    %243 = arith.mulf %242, %239 : vector<8x16xf32>
    %244 = arith.select %241, %239, %243 : vector<8x16xi1>, vector<8x16xf32>
    %c0_197 = arith.constant 0 : index
    %c0_198 = arith.constant 0 : index
    %c14 = arith.constant 14 : index
    %c0_199 = arith.constant 0 : index
    %245 = vector.load %arg3[%c0_197, %c0_198, %c14, %c0_199] : memref<1x8x16x16xf32, #tpu.memory_space<vmem>>, vector<1x8x1x16xf32>
    %246 = vector.shape_cast %245 : vector<1x8x1x16xf32> to vector<8x16xf32>
    %247 = vector.shape_cast %244 : vector<8x16xf32> to vector<1x8x1x16xf32>
    tpu.vector_store %arg3[%c0_197, %c0_198, %c14, %c0_199], %247 {strides = array<i32>} : memref<1x8x16x16xf32, #tpu.memory_space<vmem>>, vector<1x8x1x16xf32>,
    %c0_200 = arith.constant 0 : index
    %c300 = arith.constant 300 : index
    %248 = vector.load %arg5[%c0_200, %c300] : memref<8x384xf32, #tpu.memory_space<vmem>>, vector<8x16xf32>
    %cst_201 = arith.constant 0.000000e+00 : f32
    %249 = vector.broadcast %cst_201 : f32 to vector<8x16xf32>
    %250 = arith.cmpf ogt, %248, %249 : vector<8x16xf32>
    %cst_202 = arith.constant 2.000000e-01 : f32
    %251 = vector.broadcast %cst_202 : f32 to vector<8x16xf32>
    %252 = arith.mulf %251, %248 : vector<8x16xf32>
    %253 = arith.select %250, %248, %252 : vector<8x16xi1>, vector<8x16xf32>
    %c0_203 = arith.constant 0 : index
    %c0_204 = arith.constant 0 : index
    %c15 = arith.constant 15 : index
    %c0_205 = arith.constant 0 : index
    %254 = vector.load %arg3[%c0_203, %c0_204, %c15, %c0_205] : memref<1x8x16x16xf32, #tpu.memory_space<vmem>>, vector<1x8x1x16xf32>
    %255 = vector.shape_cast %254 : vector<1x8x1x16xf32> to vector<8x16xf32>
    %256 = vector.shape_cast %253 : vector<8x16xf32> to vector<1x8x1x16xf32>
    tpu.vector_store %arg3[%c0_203, %c0_204, %c15, %c0_205], %256 {strides = array<i32>} : memref<1x8x16x16xf32, #tpu.memory_space<vmem>>, vector<1x8x1x16xf32>,
    return
  }
  func.func @transform_0(%arg0: i32) -> (i32, i32, i32) {
    %c0_i32 = arith.constant 0 : i32
    %c0_i32_0 = arith.constant 0 : i32
    %c0_i32_1 = arith.constant 0 : i32
    return %arg0, %c0_i32, %c0_i32_0 : i32, i32, i32
  }
  func.func @transform_1(%arg0: i32) -> (i32, i32, i32) {
    %c0_i32 = arith.constant 0 : i32
    %c0_i32_0 = arith.constant 0 : i32
    %c0_i32_1 = arith.constant 0 : i32
    %c0_i32_2 = arith.constant 0 : i32
    return %c0_i32, %c0_i32_0, %c0_i32_1 : i32, i32, i32
  }
  func.func @transform_2(%arg0: i32) -> (i32, i32, i32, i32) {
    %c0_i32 = arith.constant 0 : i32
    %c0_i32_0 = arith.constant 0 : i32
    %c0_i32_1 = arith.constant 0 : i32
    %c0_i32_2 = arith.constant 0 : i32
    return %arg0, %c0_i32, %c0_i32_0, %c0_i32_1 : i32, i32, i32, i32
  }
}

</mosaic_0001>

<llo_original>
// kernel: tpu_custom_call.1
$region0: #{tpu_custom_call.1}
  #allocation0 [shape = 'u32[]', space=smem, size = 0x4, offset = 0x4, fixed_abs, tag = 'smem constant byte address 0x4 - core index']
  #allocation1 [shape = 'u32[72,128]{1,0:T(1,128)}', space=vmem, size = 0x9000, scoped, tag = 'internal scratch']
  #allocation2 [shape = 'bf16[4,480]{1,0:T(4,128)(2,1)}', space=vmem, size = 0x1000, scoped, tag = 'scratch operand']
  #allocation3 [shape = 'f32[8,384]{1,0:T(8,128)}', space=vmem, size = 0x3000, scoped, tag = 'scratch operand']
  %s0 = inlined_call_operand.vmem [shape: f32[2,4,256], index: 0, kind: input, shape index: {}]
  %s1 = inlined_call_operand.vmem [shape: bf16[9,8,4], index: 1, kind: input, shape index: {}]
  %s2 = inlined_call_operand.hbm [shape: f32[2,8,16,16], index: 2, kind: output, shape index: {}]
  %s3 = sld [smem:[#allocation0]]
  $region41: #{tpu_custom_call.1} parent=0
    _
  %s5 = ssub.s32 1, %s3
  %s6 = scalar_select 0, %s5, %s3
  $region1: #{tpu_custom_call.1} parent=0
    #allocation4 [shape = 'u8[131072]{0}', space=vmem, size = 0x20000, scoped, tag = 'output window, operand 0']
    #allocation5 [shape = 's32[2]{0}', space=sflag, size = 0x8, scoped, tag = 'scoped memory for tpu_custom_call.1']
    %7 = vsyncpa [#allocation5], 0
    %s8 = scalar_lea.sflag [#allocation5], 1
    %9 = vsyncpa %s8, 0
    loop: start=0, step=1, limit=4
    $region2: #{tpu_custom_call.1} parent=1 // loop_pre_header
      _
    $region3: #{tpu_custom_call.1} parent=1 // loop_header
      %s11 = sphi 0, %s15
      %p12 = scmp.ge.s32.totalorder %s11, 4
      %s21 = sphi 0, %s23
      %s24 = sphi 0, %s21
      %s25 = sphi 0, %s24
      %s41 = sphi 0, %s25
      %s45 = sphi 0, %s45
      %s47 = sphi 0, %s45
      %s48 = sphi 0, %s47
      %s62 = sphi 0, %s48
      %s68 = sphi 0, %s70
      %s71 = sphi 0, %s68
      %s72 = sphi 0, %s71
      %s88 = sphi 0, %s72
    $region4: #{tpu_custom_call.1} parent=1 // loop_header_branch
      %14 = sbr.rel (%p12) target = $region8
    $region5: #{tpu_custom_call.1} parent=1 // loop_body
      %s16 = ssub.s32 %s11, 1
      %s17 = ssub.s32 %s11, 2
      %s18 = sadd.s32 %s11, 1
      %s19 = ssub.s32 %s11, %s18
      %p20 = scmp.eq.s32.totalorder %s19, 0
      %s22 = sadd.s32 %s21, 1
      %s23 = scalar_select %p20, %s21, %s22
      %p26 = pneg %p20
      %p27 = scmp.eq.s32.totalorder %s11, 1
      %p28 = por %p26, %p27
      %p29 = scmp.ne.s32.totalorder %s21, %s24
      %p30 = scmp.eq.s32.totalorder %s11, 0
      %p31 = por %p29, %p30
      %p32 = scmp.ne.s32.totalorder %s21, %s24
      %p33 = scmp.eq.s32.totalorder %s16, 1
      %p34 = por %p32, %p33
      %p35 = scmp.ne.s32.totalorder %s24, %s25
      %p36 = scmp.eq.s32.totalorder %s16, 0
      %p37 = por %p35, %p36
      %p38 = scmp.ne.s32.totalorder %s24, %s25
      %p39 = scmp.eq.s32.totalorder %s17, 1
      %p40 = por %p38, %p39
      %p42 = scmp.ne.s32.totalorder %s25, %s41
      %p43 = scmp.eq.s32.totalorder %s17, 0
      %p44 = por %p42, %p43
      %s46 = sadd.s32 %s45, 1
      %p49 = scmp.eq.s32.totalorder %s11, 1
      %p50 = scmp.ne.s32.totalorder %s45, %s47
      %p51 = scmp.eq.s32.totalorder %s11, 0
      %p52 = por %p50, %p51
      %p53 = scmp.ne.s32.totalorder %s45, %s47
      %p54 = scmp.eq.s32.totalorder %s16, 1
      %p55 = por %p53, %p54
      %p56 = scmp.ne.s32.totalorder %s47, %s48
      %p57 = scmp.eq.s32.totalorder %s16, 0
      %p58 = por %p56, %p57
      %p59 = scmp.ne.s32.totalorder %s47, %s48
      %p60 = scmp.eq.s32.totalorder %s17, 1
      %p61 = por %p59, %p60
      %p63 = scmp.ne.s32.totalorder %s48, %s62
      %p64 = scmp.eq.s32.totalorder %s17, 0
      %p65 = por %p63, %p64
      %s66 = ssub.s32 %s11, %s18
      %p67 = scmp.eq.s32.totalorder %s66, 0
      %s69 = sadd.s32 %s68, 1
      %s70 = scalar_select %p67, %s68, %s69
      %p73 = pneg %p67
      %p74 = scmp.eq.s32.totalorder %s11, 1
      %p75 = por %p73, %p74
      %p76 = scmp.ne.s32.totalorder %s68, %s71
      %p77 = scmp.eq.s32.totalorder %s11, 0
      %p78 = por %p76, %p77
      %p79 = scmp.ne.s32.totalorder %s68, %s71
      %p80 = scmp.eq.s32.totalorder %s16, 1
      %p81 = por %p79, %p80
      %p82 = scmp.ne.s32.totalorder %s71, %s72
      %p83 = scmp.eq.s32.totalorder %s16, 0
      %p84 = por %p82, %p83
      %p85 = scmp.ne.s32.totalorder %s71, %s72
      %p86 = scmp.eq.s32.totalorder %s17, 1
      %p87 = por %p85, %p86
      %p89 = scmp.ne.s32.totalorder %s72, %s88
      %p90 = scmp.eq.s32.totalorder %s17, 0
      %p91 = por %p89, %p90
      %p92 = scmp.le.s32.totalorder 1, %s11
      %p93 = scmp.lt.s32.totalorder %s11, 3
      %p94 = pnand %p92, %p93
      %p95 = pneg %p94
      // Predicated region
      $region9: #{tpu_custom_call.1} parent=5 // pred_check
        _
      $region10: #{tpu_custom_call.1} parent=5 // pred_check_branch
        %97 = sbr.rel (%p94) target = $region12
      $region11: #{tpu_custom_call.1} parent=5 // pred_region
        %s98 = ssub.s32 %s11, 1
        // Predicated region
        $region13: #{tpu_custom_call.1} parent=11 // pred_check
          %p99 = pneg %p58
        $region14: #{tpu_custom_call.1} parent=11 // pred_check_branch
          %101 = sbr.rel (%p99) target = $region16
        $region15: #{tpu_custom_call.1} parent=11 // pred_region
          _
        $region16: #{tpu_custom_call.1} parent=11 // pred_fallthru
          _
      $region12: #{tpu_custom_call.1} parent=5 // pred_fallthru
        _
      %p102 = scmp.lt.s32.totalorder %s11, 2
      // Predicated region
      $region17: #{tpu_custom_call.1} parent=5 // pred_check
        %p103 = pneg %p102
      $region18: #{tpu_custom_call.1} parent=5 // pred_check_branch
        %105 = sbr.rel (%p103) target = $region20
      $region19: #{tpu_custom_call.1} parent=5 // pred_region
        // Predicated region
        $region21: #{tpu_custom_call.1} parent=19 // pred_check
          %p106 = pneg %p31
        $region22: #{tpu_custom_call.1} parent=19 // pred_check_branch
          %108 = sbr.rel (%p106) target = $region24
        $region23: #{tpu_custom_call.1} parent=19 // pred_region
          %p109 = scmp.lt.s32.totalorder %s11, 1
          %s110 = scalar_select %p109, %s11, 1
          %s111 = smul.addr %s110, 2
          %s112 = smul.addr %s111, 4
          %s113 = scalar_lea.vmem %s0, %s112
        $region24: #{tpu_custom_call.1} parent=19 // pred_fallthru
          _
      $region20: #{tpu_custom_call.1} parent=5 // pred_fallthru
        _
      %p114 = scmp.le.s32.totalorder 1, %s11
      %p115 = scmp.lt.s32.totalorder %s11, 3
      %p116 = pnand %p114, %p115
      %p117 = pneg %p116
      // Predicated region
      $region25: #{tpu_custom_call.1} parent=5 // pred_check
        _
      $region26: #{tpu_custom_call.1} parent=5 // pred_check_branch
        %119 = sbr.rel (%p116) target = $region28
      $region27: #{tpu_custom_call.1} parent=5 // pred_region
        %s120 = ssub.s32 %s11, 1
        %p121 = scmp.lt.s32.totalorder %s16, 1
        %s122 = scalar_select %p121, %s16, 1
        %s123 = smul.addr %s122, 2
        %s124 = smul.addr %s123, 4
        %s125 = scalar_lea.vmem %s0, %s124
        %p126 = pneg %p37
        %p127 = pneg %p34
        %p128 = pneg %p58
        %p129 = pneg %p55
        %p130 = pneg %p84
        %p131 = pneg %p81
        %s132 = sand.u32 %s71, 1
        %s133 = scalar_lea.sflag [#allocation5], %s132
        %s134 = sand.u32 %s71, 1
        %s135 = smul.addr %s134, 128
        %s136 = scalar_lea.vmem [#allocation4], %s135
        %p137 = scmp.lt.s32.totalorder %s16, 1
        %s138 = scalar_select %p137, %s16, 1
        %s139 = smul.addr %s138, 2
        %s140 = smul.addr %s139, 4
        %s141 = scalar_lea.vmem %s0, %s140
        %vm143 = vcmask 1041408
        %vm144 = vcmask 1043458
        %vm145 = vmor %vm144, %vm143
        %vm146 = vcmask 1045508
        %vm147 = vmor %vm146, %vm145
        %vm148 = vcmask 785414
        %vm149 = vmor %vm148, %vm147
        %150 = vst.msk [vmem:[#allocation2] sm:$0xff] %vm149, 0
        %v151 = vld [vmem:[%s141] sm:$0xf]
        %v152 = vpack.c.bf16 %v151, %v151
        %v154 = vrot.slane %v152, 2
        %v157 = vsel %vm143, %v152, %v154
        %159 = vrot.lane.b32.xlu0 %v157, 42
        %v160 = vpop.permute.xlu0 %159
        %vm162 = vcmask 468304
        %163 = vst.msk [vmem:[#allocation2] sm:$0x3] %vm162, %v160
        %v164 = vld [vmem:[%s141] sm:$0xf]
        %v165 = vpack.c.bf16 %v164, %v164
        %v167 = vrot.slane %v165, 2
        %v170 = vsel %vm143, %v165, %v167
        %172 = vrot.lane.b32.xlu0 %v170, 46
        %v173 = vpop.permute.xlu0 %172
        %vm175 = vcmask 632304
        %176 = vst.msk [vmem:[#allocation2] sm:$0x3] %vm175, %v173
        %v177 = vld [vmem:[%s141] sm:$0xf]
        %v178 = vpack.c.bf16 %v177, %v177
        %v180 = vrot.slane %v178, 2
        %v183 = vsel %vm143, %v178, %v180
        %185 = vrot.lane.b32.xlu0 %v183, 50
        %v186 = vpop.permute.xlu0 %185
        %vm188 = vcmask 796304
        %189 = vst.msk [vmem:[#allocation2] sm:$0x3] %vm188, %v186
        %v190 = vld [vmem:[%s141] sm:$0xf]
        %v191 = vpack.c.bf16 %v190, %v190
        %v193 = vrot.slane %v191, 2
        %v196 = vsel %vm143, %v191, %v193
        %198 = vrot.lane.b32.xlu0 %v196, 54
        %v199 = vpop.permute.xlu0 %198
        %vm201 = vcmask 960304
        %202 = vst.msk [vmem:[#allocation2] sm:$0x3] %vm201, %v199
        %v203 = vld [vmem:[%s141] sm:$0xf]
        %v204 = vpack.c.bf16 %v203, %v203
        %v206 = vrot.slane %v204, 2
        %v209 = vsel %vm143, %v204, %v206
        %211 = vrot.lane.b32.xlu0 %v209, 58
        %v212 = vpop.permute.xlu0 %211
        %v213 = vrot.slane %v212, 6
        %vm214 = vcmask 474112
        %v215 = vsel %vm214, %v213, %v212
        %vm217 = vcmask 1042384
        %vm218 = vcmask 76802
        %vm219 = vmor %vm218, %vm217
        %220 = vst.msk [vmem:[#allocation2] sm:$0xf] %vm219, %v215
        %v221 = vld [vmem:[%s141] sm:$0xf]
        %v222 = vpack.c.bf16 %v221, %v221
        %v224 = vrot.slane %v222, 2
        %v227 = vsel %vm143, %v222, %v224
        %229 = vrot.lane.b32.xlu0 %v227, 62
        %v230 = vpop.permute.xlu0 %229
        %vm232 = vcmask 238704
        %233 = vst.msk [vmem:[#allocation2 + $0x2] sm:$0x3] %vm232, %v230
        %v234 = vld [vmem:[%s141] sm:$0xf]
        %v235 = vpack.c.bf16 %v234, %v234
        %v237 = vrot.slane %v235, 2
        %v240 = vsel %vm143, %v235, %v237
        %242 = vrot.lane.b32.xlu0 %v240, 66
        %v243 = vpop.permute.xlu0 %242
        %vm245 = vcmask 402704
        %246 = vst.msk [vmem:[#allocation2 + $0x2] sm:$0x3] %vm245, %v243
        %v247 = vld [vmem:[%s141] sm:$0xf]
        %v248 = vpack.c.bf16 %v247, %v247
        %v250 = vrot.slane %v248, 2
        %v253 = vsel %vm143, %v248, %v250
        %255 = vrot.lane.b32.xlu0 %v253, 70
        %v256 = vpop.permute.xlu0 %255
        %vm258 = vcmask 566704
        %259 = vst.msk [vmem:[#allocation2 + $0x2] sm:$0x3] %vm258, %v256
        %v260 = vld [vmem:[%s141 + $0x4] sm:$0xf]
        %v261 = vpack.c.bf16 %v260, %v260
        %v263 = vrot.slane %v261, 2
        %v266 = vsel %vm143, %v261, %v263
        %268 = vrot.lane.b32.xlu0 %v266, 74
        %v269 = vpop.permute.xlu0 %268
        %vm271 = vcmask 730704
        %272 = vst.msk [vmem:[#allocation2 + $0x2] sm:$0x3] %vm271, %v269
        %v273 = vld [vmem:[%s141 + $0x4] sm:$0xf]
        %v274 = vpack.c.bf16 %v273, %v273
        %v276 = vrot.slane %v274, 2
        %v279 = vsel %vm143, %v274, %v276
        %281 = vrot.lane.b32.xlu0 %v279, 78
        %v282 = vpop.permute.xlu0 %281
        %vm284 = vcmask 894704
        %285 = vst.msk [vmem:[#allocation2 + $0x2] sm:$0x3] %vm284, %v282
        %v286 = vld [vmem:[%s141 + $0x4] sm:$0xf]
        %v287 = vpack.c.bf16 %v286, %v286
        %v289 = vrot.slane %v287, 2
        %v292 = vsel %vm143, %v287, %v289
        %294 = vrot.lane.b32.xlu0 %v292, 82
        %v295 = vpop.permute.xlu0 %294
        %v296 = vrot.slane %v295, 6
        %vm297 = vcmask 670720
        %v298 = vsel %vm297, %v296, %v295
        %vm300 = vcmask 1042320
        %vm301 = vcmask 11266
        %vm302 = vmor %vm301, %vm300
        %303 = vst.msk [vmem:[#allocation2 + $0x2] sm:$0xf] %vm302, %v298
        %v304 = vld [vmem:[%s141 + $0x4] sm:$0xf]
        %v305 = vpack.c.bf16 %v304, %v304
        %v307 = vrot.slane %v305, 2
        %v310 = vsel %vm143, %v305, %v307
        %312 = vrot.lane.b32.xlu0 %v310, 86
        %v313 = vpop.permute.xlu0 %312
        %vm315 = vcmask 173104
        %316 = vst.msk [vmem:[#allocation2 + $0x4] sm:$0x3] %vm315, %v313
        %v317 = vld [vmem:[%s141 + $0x4] sm:$0xf]
        %v318 = vpack.c.bf16 %v317, %v317
        %v320 = vrot.slane %v318, 2
        %v323 = vsel %vm143, %v318, %v320
        %325 = vrot.lane.b32.xlu0 %v323, 90
        %v326 = vpop.permute.xlu0 %325
        %vm328 = vcmask 337104
        %329 = vst.msk [vmem:[#allocation2 + $0x4] sm:$0x3] %vm328, %v326
        %v330 = vld [vmem:[%s141 + $0x4] sm:$0xf]
        %v331 = vpack.c.bf16 %v330, %v330
        %v333 = vrot.slane %v331, 2
        %v336 = vsel %vm143, %v331, %v333
        %338 = vrot.lane.b32.xlu0 %v336, 94
        %v339 = vpop.permute.xlu0 %338
        %vm341 = vcmask 501104
        %342 = vst.msk [vmem:[#allocation2 + $0x4] sm:$0x3] %vm341, %v339
        %v343 = vld [vmem:[%s141 + $0x4] sm:$0xf]
        %v344 = vpack.c.bf16 %v343, %v343
        %v346 = vrot.slane %v344, 2
        %v349 = vsel %vm143, %v344, %v346
        %351 = vrot.lane.b32.xlu0 %v349, 98
        %v352 = vpop.permute.xlu0 %351
        %vm354 = vcmask 665104
        %355 = vst.msk [vmem:[#allocation2 + $0x4] sm:$0x3] %vm354, %v352
        %v356 = vld [vmem:[%s141 + $0x4] sm:$0xf]
        %v357 = vpack.c.bf16 %v356, %v356
        %v359 = vrot.slane %v357, 2
        %v362 = vsel %vm143, %v357, %v359
        %364 = vrot.lane.b32.xlu0 %v362, 102
        %v365 = vpop.permute.xlu0 %364
        %vm367 = vcmask 829104
        %368 = vst.msk [vmem:[#allocation2 + $0x4] sm:$0x3] %vm367, %v365
        %v369 = vld [vmem:[%s1] sm:$0xf]
        %v370 = vld [vmem:[#allocation2] sm:$0x3f]
        %s371 = scalar_lea.vmem %s1, 4
        %v372 = vld [vmem:[%s371] sm:$0xf]
        %v373 = vld [vmem:[#allocation2] sm:$0xff]
        %375 = vst [vmem:[#allocation1] ss:$4 sm:$0xff] %v373
        %v376 = vld.sshfl [vmem:[#allocation1] sm:$0xff pattern:$0x73625140]
        %v378 = vld.sshfl [vmem:[#allocation1 + $0x8] sm:$0xff pattern:$0x73625140]
        %v380 = vld.sshfl [vmem:[#allocation1 + $0x10] sm:$0xff pattern:$0x73625140]
        %v382 = vld.sshfl [vmem:[#allocation1 + $0x18] sm:$0xff pattern:$0x73625140]
        %384 = vrot.lane.b32.xlu0 %v376, 126
        %v385 = vpop.permute.xlu0 %384
        %386 = vrot.lane.b32.xlu0 %v378, 126
        %v387 = vpop.permute.xlu0 %386
        %388 = vrot.lane.b32.xlu0 %v380, 126
        %v389 = vpop.permute.xlu0 %388
        %390 = vrot.lane.b32.xlu0 %v382, 126
        %v391 = vpop.permute.xlu0 %390
        %vm392 = vcmask 1031168
        %v393 = vsel %vm392, %v385, %v387
        %v394 = vsel %vm392, %v387, %v389
        %v395 = vsel %vm392, %v389, %v391
        %vm396 = vcmask 31744
        %v398 = vsel %vm396, %v372, 0
        %v401 = vsel %vm143, %v393, 0
        %v404 = vsel %vm143, %v394, 0
        %v407 = vsel %vm143, %v395, 0
        %409 = vmatpush.bf16.msra.mxu0 0
        %410 = vmatpush.bf16.msra.mxu0 0
        %411 = vmatpush.bf16.msra.mxu0 0
        %412 = vmatpush.bf16.msra.mxu0 0
        %413 = vmatpush.bf16.msra.mxu0 0
        %414 = vmatpush.bf16.msra.mxu0 0
        %415 = vmatpush.bf16.msra.mxu0 0
        %416 = vmatpush.bf16.msra.mxu0 %v401
        %417 = vmatmul.bf16.gmra.mxu0 %v398
        %v418 = vpop.f32.mrf.mxu0
        %v419 = vadd.f32 0.0, %v418
        %v420 = vpop.f32.mrf.mxu0
        %421 = vdwg.mxu0
        %422 = vmatpush.bf16.msra.mxu0 0
        %423 = vmatpush.bf16.msra.mxu0 0
        %424 = vmatpush.bf16.msra.mxu0 0
        %425 = vmatpush.bf16.msra.mxu0 0
        %426 = vmatpush.bf16.msra.mxu0 0
        %427 = vmatpush.bf16.msra.mxu0 0
        %428 = vmatpush.bf16.msra.mxu0 0
        %429 = vmatpush.bf16.msra.mxu0 %v404
        %430 = vmatmul.bf16.gmra.mxu0 %v398
        %v431 = vpop.f32.mrf.mxu0
        %v432 = vadd.f32 0.0, %v431
        %v433 = vpop.f32.mrf.mxu0
        %434 = vdwg.mxu0
        %435 = vmatpush.bf16.msra.mxu0 0
        %436 = vmatpush.bf16.msra.mxu0 0
        %437 = vmatpush.bf16.msra.mxu0 0
        %438 = vmatpush.bf16.msra.mxu0 0
        %439 = vmatpush.bf16.msra.mxu0 0
        %440 = vmatpush.bf16.msra.mxu0 0
        %441 = vmatpush.bf16.msra.mxu0 0
        %442 = vmatpush.bf16.msra.mxu0 %v407
        %443 = vmatmul.bf16.gmra.mxu0 %v398
        %v444 = vpop.f32.mrf.mxu0
        %v445 = vadd.f32 0.0, %v444
        %v446 = vpop.f32.mrf.mxu0
        %447 = vdwg.mxu0
        %449 = vst [vmem:[#allocation1] ss:$4 sm:$0xff] %v370
        %v450 = vld.sshfl [vmem:[#allocation1] sm:$0xff pattern:$0x73625140]
        %v451 = vld.sshfl [vmem:[#allocation1 + $0x8] sm:$0xff pattern:$0x73625140]
        %v452 = vld.sshfl [vmem:[#allocation1 + $0x10] sm:$0xff pattern:$0x73625140]
        %v454 = vsel %vm396, %v369, 0
        %v456 = vsel %vm143, %v450, 0
        %v458 = vsel %vm143, %v451, 0
        %v460 = vsel %vm143, %v452, 0
        %462 = vmatpush.bf16.msra.mxu0 0
        %463 = vmatpush.bf16.msra.mxu0 0
        %464 = vmatpush.bf16.msra.mxu0 0
        %465 = vmatpush.bf16.msra.mxu0 0
        %466 = vmatpush.bf16.msra.mxu0 0
        %467 = vmatpush.bf16.msra.mxu0 0
        %468 = vmatpush.bf16.msra.mxu0 0
        %469 = vmatpush.bf16.msra.mxu0 %v456
        %470 = vmatmul.bf16.gmra.mxu0 %v454
        %v471 = vpop.f32.mrf.mxu0
        %v472 = vadd.f32 %v419, %v471
        %v473 = vpop.f32.mrf.mxu0
        %474 = vdwg.mxu0
        %475 = vmatpush.bf16.msra.mxu0 0
        %476 = vmatpush.bf16.msra.mxu0 0
        %477 = vmatpush.bf16.msra.mxu0 0
        %478 = vmatpush.bf16.msra.mxu0 0
        %479 = vmatpush.bf16.msra.mxu0 0
        %480 = vmatpush.bf16.msra.mxu0 0
        %481 = vmatpush.bf16.msra.mxu0 0
        %482 = vmatpush.bf16.msra.mxu0 %v458
        %483 = vmatmul.bf16.gmra.mxu0 %v454
        %v484 = vpop.f32.mrf.mxu0
        %v485 = vadd.f32 %v432, %v484
        %v486 = vpop.f32.mrf.mxu0
        %487 = vdwg.mxu0
        %488 = vmatpush.bf16.msra.mxu0 0
        %489 = vmatpush.bf16.msra.mxu0 0
        %490 = vmatpush.bf16.msra.mxu0 0
        %491 = vmatpush.bf16.msra.mxu0 0
        %492 = vmatpush.bf16.msra.mxu0 0
        %493 = vmatpush.bf16.msra.mxu0 0
        %494 = vmatpush.bf16.msra.mxu0 0
        %495 = vmatpush.bf16.msra.mxu0 %v460
        %496 = vmatmul.bf16.gmra.mxu0 %v454
        %v497 = vpop.f32.mrf.mxu0
        %v498 = vadd.f32 %v445, %v497
        %v499 = vpop.f32.mrf.mxu0
        %500 = vdwg.mxu0
        %s501 = scalar_lea.vmem %s1, 8
        %v502 = vld [vmem:[%s501] sm:$0xf]
        %v503 = vld [vmem:[#allocation2] sm:$0xff]
        %505 = vst [vmem:[#allocation1] ss:$4 sm:$0xff] %v503
        %v506 = vld.sshfl [vmem:[#allocation1] sm:$0xff pattern:$0x73625140]
        %v508 = vld.sshfl [vmem:[#allocation1 + $0x8] sm:$0xff pattern:$0x73625140]
        %v510 = vld.sshfl [vmem:[#allocation1 + $0x10] sm:$0xff pattern:$0x73625140]
        %v512 = vld.sshfl [vmem:[#allocation1 + $0x18] sm:$0xff pattern:$0x73625140]
        %514 = vrot.lane.b32.xlu0 %v506, 124
        %v515 = vpop.permute.xlu0 %514
        %516 = vrot.lane.b32.xlu0 %v508, 124
        %v517 = vpop.permute.xlu0 %516
        %518 = vrot.lane.b32.xlu0 %v510, 124
        %v519 = vpop.permute.xlu0 %518
        %520 = vrot.lane.b32.xlu0 %v512, 124
        %v521 = vpop.permute.xlu0 %520
        %vm522 = vcmask 1014784
        %v523 = vsel %vm522, %v515, %v517
        %v524 = vsel %vm522, %v517, %v519
        %v525 = vsel %vm522, %v519, %v521
        %v527 = vsel %vm396, %v502, 0
        %v530 = vsel %vm143, %v523, 0
        %v533 = vsel %vm143, %v524, 0
        %v536 = vsel %vm143, %v525, 0
        %538 = vmatpush.bf16.msra.mxu0 0
        %539 = vmatpush.bf16.msra.mxu0 0
        %540 = vmatpush.bf16.msra.mxu0 0
        %541 = vmatpush.bf16.msra.mxu0 0
        %542 = vmatpush.bf16.msra.mxu0 0
        %543 = vmatpush.bf16.msra.mxu0 0
        %544 = vmatpush.bf16.msra.mxu0 0
        %545 = vmatpush.bf16.msra.mxu0 %v530
        %546 = vmatmul.bf16.gmra.mxu0 %v527
        %v547 = vpop.f32.mrf.mxu0
        %v548 = vadd.f32 0.0, %v547
        %v549 = vpop.f32.mrf.mxu0
        %550 = vdwg.mxu0
        %551 = vmatpush.bf16.msra.mxu0 0
        %552 = vmatpush.bf16.msra.mxu0 0
        %553 = vmatpush.bf16.msra.mxu0 0
        %554 = vmatpush.bf16.msra.mxu0 0
        %555 = vmatpush.bf16.msra.mxu0 0
        %556 = vmatpush.bf16.msra.mxu0 0
        %557 = vmatpush.bf16.msra.mxu0 0
        %558 = vmatpush.bf16.msra.mxu0 %v533
        %559 = vmatmul.bf16.gmra.mxu0 %v527
        %v560 = vpop.f32.mrf.mxu0
        %v561 = vadd.f32 0.0, %v560
        %v562 = vpop.f32.mrf.mxu0
        %563 = vdwg.mxu0
        %564 = vmatpush.bf16.msra.mxu0 0
        %565 = vmatpush.bf16.msra.mxu0 0
        %566 = vmatpush.bf16.msra.mxu0 0
        %567 = vmatpush.bf16.msra.mxu0 0
        %568 = vmatpush.bf16.msra.mxu0 0
        %569 = vmatpush.bf16.msra.mxu0 0
        %570 = vmatpush.bf16.msra.mxu0 0
        %571 = vmatpush.bf16.msra.mxu0 %v536
        %572 = vmatmul.bf16.gmra.mxu0 %v527
        %v573 = vpop.f32.mrf.mxu0
        %v574 = vadd.f32 0.0, %v573
        %v575 = vpop.f32.mrf.mxu0
        %576 = vdwg.mxu0
        %v577 = vadd.f32 %v472, %v548
        %v578 = vadd.f32 %v485, %v561
        %v579 = vadd.f32 %v498, %v574
        %s580 = scalar_lea.vmem %s1, 12
        %v581 = vld [vmem:[%s580] sm:$0xf]
        %v582 = vld [vmem:[#allocation2] sm:$0xff]
        %584 = vst [vmem:[#allocation1] ss:$4 sm:$0xff] %v582
        %v585 = vld.sshfl [vmem:[#allocation1] sm:$0xff pattern:$0x73625140]
        %v587 = vld.sshfl [vmem:[#allocation1 + $0x8] sm:$0xff pattern:$0x73625140]
        %v589 = vld.sshfl [vmem:[#allocation1 + $0x10] sm:$0xff pattern:$0x73625140]
        %v591 = vld.sshfl [vmem:[#allocation1 + $0x18] sm:$0xff pattern:$0x73625140]
        %593 = vrot.lane.b32.xlu0 %v585, 88
        %v594 = vpop.permute.xlu0 %593
        %595 = vrot.lane.b32.xlu0 %v587, 88
        %v596 = vpop.permute.xlu0 %595
        %597 = vrot.lane.b32.xlu0 %v589, 88
        %v598 = vpop.permute.xlu0 %597
        %599 = vrot.lane.b32.xlu0 %v591, 88
        %v600 = vpop.permute.xlu0 %599
        %vm601 = vcmask 719872
        %v602 = vsel %vm601, %v594, %v596
        %v603 = vsel %vm601, %v596, %v598
        %v604 = vsel %vm601, %v598, %v600
        %v606 = vsel %vm396, %v581, 0
        %v609 = vsel %vm143, %v602, 0
        %v612 = vsel %vm143, %v603, 0
        %v615 = vsel %vm143, %v604, 0
        %617 = vmatpush.bf16.msra.mxu0 0
        %618 = vmatpush.bf16.msra.mxu0 0
        %619 = vmatpush.bf16.msra.mxu0 0
        %620 = vmatpush.bf16.msra.mxu0 0
        %621 = vmatpush.bf16.msra.mxu0 0
        %622 = vmatpush.bf16.msra.mxu0 0
        %623 = vmatpush.bf16.msra.mxu0 0
        %624 = vmatpush.bf16.msra.mxu0 %v609
        %625 = vmatmul.bf16.gmra.mxu0 %v606
        %v626 = vpop.f32.mrf.mxu0
        %v627 = vadd.f32 0.0, %v626
        %v628 = vpop.f32.mrf.mxu0
        %629 = vdwg.mxu0
        %630 = vmatpush.bf16.msra.mxu0 0
        %631 = vmatpush.bf16.msra.mxu0 0
        %632 = vmatpush.bf16.msra.mxu0 0
        %633 = vmatpush.bf16.msra.mxu0 0
        %634 = vmatpush.bf16.msra.mxu0 0
        %635 = vmatpush.bf16.msra.mxu0 0
        %636 = vmatpush.bf16.msra.mxu0 0
        %637 = vmatpush.bf16.msra.mxu0 %v612
        %638 = vmatmul.bf16.gmra.mxu0 %v606
        %v639 = vpop.f32.mrf.mxu0
        %v640 = vadd.f32 0.0, %v639
        %v641 = vpop.f32.mrf.mxu0
        %642 = vdwg.mxu0
        %643 = vmatpush.bf16.msra.mxu0 0
        %644 = vmatpush.bf16.msra.mxu0 0
        %645 = vmatpush.bf16.msra.mxu0 0
        %646 = vmatpush.bf16.msra.mxu0 0
        %647 = vmatpush.bf16.msra.mxu0 0
        %648 = vmatpush.bf16.msra.mxu0 0
        %649 = vmatpush.bf16.msra.mxu0 0
        %650 = vmatpush.bf16.msra.mxu0 %v615
        %651 = vmatmul.bf16.gmra.mxu0 %v606
        %v652 = vpop.f32.mrf.mxu0
        %v653 = vadd.f32 0.0, %v652
        %v654 = vpop.f32.mrf.mxu0
        %655 = vdwg.mxu0
        %v656 = vadd.f32 %v577, %v627
        %v657 = vadd.f32 %v578, %v640
        %v658 = vadd.f32 %v579, %v653
        %s659 = scalar_lea.vmem %s1, 16
        %v660 = vld [vmem:[%s659] sm:$0xf]
        %v661 = vld [vmem:[#allocation2] sm:$0xff]
        %663 = vst [vmem:[#allocation1] ss:$4 sm:$0xff] %v661
        %v664 = vld.sshfl [vmem:[#allocation1] sm:$0xff pattern:$0x73625140]
        %v666 = vld.sshfl [vmem:[#allocation1 + $0x8] sm:$0xff pattern:$0x73625140]
        %v668 = vld.sshfl [vmem:[#allocation1 + $0x10] sm:$0xff pattern:$0x73625140]
        %v670 = vld.sshfl [vmem:[#allocation1 + $0x18] sm:$0xff pattern:$0x73625140]
        %672 = vrot.lane.b32.xlu0 %v664, 86
        %v673 = vpop.permute.xlu0 %672
        %674 = vrot.lane.b32.xlu0 %v666, 86
        %v675 = vpop.permute.xlu0 %674
        %676 = vrot.lane.b32.xlu0 %v668, 86
        %v677 = vpop.permute.xlu0 %676
        %678 = vrot.lane.b32.xlu0 %v670, 86
        %v679 = vpop.permute.xlu0 %678
        %vm680 = vcmask 703488
        %v681 = vsel %vm680, %v673, %v675
        %v682 = vsel %vm680, %v675, %v677
        %v683 = vsel %vm680, %v677, %v679
        %v685 = vsel %vm396, %v660, 0
        %v688 = vsel %vm143, %v681, 0
        %v691 = vsel %vm143, %v682, 0
        %v694 = vsel %vm143, %v683, 0
        %696 = vmatpush.bf16.msra.mxu0 0
        %697 = vmatpush.bf16.msra.mxu0 0
        %698 = vmatpush.bf16.msra.mxu0 0
        %699 = vmatpush.bf16.msra.mxu0 0
        %700 = vmatpush.bf16.msra.mxu0 0
        %701 = vmatpush.bf16.msra.mxu0 0
        %702 = vmatpush.bf16.msra.mxu0 0
        %703 = vmatpush.bf16.msra.mxu0 %v688
        %704 = vmatmul.bf16.gmra.mxu0 %v685
        %v705 = vpop.f32.mrf.mxu0
        %v706 = vadd.f32 0.0, %v705
        %v707 = vpop.f32.mrf.mxu0
        %708 = vdwg.mxu0
        %709 = vmatpush.bf16.msra.mxu0 0
        %710 = vmatpush.bf16.msra.mxu0 0
        %711 = vmatpush.bf16.msra.mxu0 0
        %712 = vmatpush.bf16.msra.mxu0 0
        %713 = vmatpush.bf16.msra.mxu0 0
        %714 = vmatpush.bf16.msra.mxu0 0
        %715 = vmatpush.bf16.msra.mxu0 0
        %716 = vmatpush.bf16.msra.mxu0 %v691
        %717 = vmatmul.bf16.gmra.mxu0 %v685
        %v718 = vpop.f32.mrf.mxu0
        %v719 = vadd.f32 0.0, %v718
        %v720 = vpop.f32.mrf.mxu0
        %721 = vdwg.mxu0
        %722 = vmatpush.bf16.msra.mxu0 0
        %723 = vmatpush.bf16.msra.mxu0 0
        %724 = vmatpush.bf16.msra.mxu0 0
        %725 = vmatpush.bf16.msra.mxu0 0
        %726 = vmatpush.bf16.msra.mxu0 0
        %727 = vmatpush.bf16.msra.mxu0 0
        %728 = vmatpush.bf16.msra.mxu0 0
        %729 = vmatpush.bf16.msra.mxu0 %v694
        %730 = vmatmul.bf16.gmra.mxu0 %v685
        %v731 = vpop.f32.mrf.mxu0
        %v732 = vadd.f32 0.0, %v731
        %v733 = vpop.f32.mrf.mxu0
        %734 = vdwg.mxu0
        %v735 = vadd.f32 %v656, %v706
        %v736 = vadd.f32 %v657, %v719
        %v737 = vadd.f32 %v658, %v732
        %s738 = scalar_lea.vmem %s1, 20
        %v739 = vld [vmem:[%s738] sm:$0xf]
        %v740 = vld [vmem:[#allocation2] sm:$0xff]
        %742 = vst [vmem:[#allocation1] ss:$4 sm:$0xff] %v740
        %v743 = vld.sshfl [vmem:[#allocation1] sm:$0xff pattern:$0x73625140]
        %v745 = vld.sshfl [vmem:[#allocation1 + $0x8] sm:$0xff pattern:$0x73625140]
        %v747 = vld.sshfl [vmem:[#allocation1 + $0x10] sm:$0xff pattern:$0x73625140]
        %v749 = vld.sshfl [vmem:[#allocation1 + $0x18] sm:$0xff pattern:$0x73625140]
        %751 = vrot.lane.b32.xlu0 %v743, 84
        %v752 = vpop.permute.xlu0 %751
        %753 = vrot.lane.b32.xlu0 %v745, 84
        %v754 = vpop.permute.xlu0 %753
        %755 = vrot.lane.b32.xlu0 %v747, 84
        %v756 = vpop.permute.xlu0 %755
        %757 = vrot.lane.b32.xlu0 %v749, 84
        %v758 = vpop.permute.xlu0 %757
        %vm759 = vcmask 687104
        %v760 = vsel %vm759, %v752, %v754
        %v761 = vsel %vm759, %v754, %v756
        %v762 = vsel %vm759, %v756, %v758
        %v764 = vsel %vm396, %v739, 0
        %v767 = vsel %vm143, %v760, 0
        %v770 = vsel %vm143, %v761, 0
        %v773 = vsel %vm143, %v762, 0
        %775 = vmatpush.bf16.msra.mxu0 0
        %776 = vmatpush.bf16.msra.mxu0 0
        %777 = vmatpush.bf16.msra.mxu0 0
        %778 = vmatpush.bf16.msra.mxu0 0
        %779 = vmatpush.bf16.msra.mxu0 0
        %780 = vmatpush.bf16.msra.mxu0 0
        %781 = vmatpush.bf16.msra.mxu0 0
        %782 = vmatpush.bf16.msra.mxu0 %v767
        %783 = vmatmul.bf16.gmra.mxu0 %v764
        %v784 = vpop.f32.mrf.mxu0
        %v785 = vadd.f32 0.0, %v784
        %v786 = vpop.f32.mrf.mxu0
        %787 = vdwg.mxu0
        %788 = vmatpush.bf16.msra.mxu0 0
        %789 = vmatpush.bf16.msra.mxu0 0
        %790 = vmatpush.bf16.msra.mxu0 0
        %791 = vmatpush.bf16.msra.mxu0 0
        %792 = vmatpush.bf16.msra.mxu0 0
        %793 = vmatpush.bf16.msra.mxu0 0
        %794 = vmatpush.bf16.msra.mxu0 0
        %795 = vmatpush.bf16.msra.mxu0 %v770
        %796 = vmatmul.bf16.gmra.mxu0 %v764
        %v797 = vpop.f32.mrf.mxu0
        %v798 = vadd.f32 0.0, %v797
        %v799 = vpop.f32.mrf.mxu0
        %800 = vdwg.mxu0
        %801 = vmatpush.bf16.msra.mxu0 0
        %802 = vmatpush.bf16.msra.mxu0 0
        %803 = vmatpush.bf16.msra.mxu0 0
        %804 = vmatpush.bf16.msra.mxu0 0
        %805 = vmatpush.bf16.msra.mxu0 0
        %806 = vmatpush.bf16.msra.mxu0 0
        %807 = vmatpush.bf16.msra.mxu0 0
        %808 = vmatpush.bf16.msra.mxu0 %v773
        %809 = vmatmul.bf16.gmra.mxu0 %v764
        %v810 = vpop.f32.mrf.mxu0
        %v811 = vadd.f32 0.0, %v810
        %v812 = vpop.f32.mrf.mxu0
        %813 = vdwg.mxu0
        %v814 = vadd.f32 %v735, %v785
        %v815 = vadd.f32 %v736, %v798
        %v816 = vadd.f32 %v737, %v811
        %s817 = scalar_lea.vmem %s1, 24
        %v818 = vld [vmem:[%s817] sm:$0xf]
        %v819 = vld [vmem:[#allocation2] sm:$0xff]
        %821 = vst [vmem:[#allocation1] ss:$4 sm:$0xff] %v819
        %v822 = vld.sshfl [vmem:[#allocation1] sm:$0xff pattern:$0x73625140]
        %v824 = vld.sshfl [vmem:[#allocation1 + $0x8] sm:$0xff pattern:$0x73625140]
        %v826 = vld.sshfl [vmem:[#allocation1 + $0x10] sm:$0xff pattern:$0x73625140]
        %v828 = vld.sshfl [vmem:[#allocation1 + $0x18] sm:$0xff pattern:$0x73625140]
        %830 = vrot.lane.b32.xlu0 %v822, 48
        %v831 = vpop.permute.xlu0 %830
        %832 = vrot.lane.b32.xlu0 %v824, 48
        %v833 = vpop.permute.xlu0 %832
        %834 = vrot.lane.b32.xlu0 %v826, 48
        %v835 = vpop.permute.xlu0 %834
        %836 = vrot.lane.b32.xlu0 %v828, 48
        %v837 = vpop.permute.xlu0 %836
        %vm838 = vcmask 392192
        %v839 = vsel %vm838, %v831, %v833
        %v840 = vsel %vm838, %v833, %v835
        %v841 = vsel %vm838, %v835, %v837
        %v843 = vsel %vm396, %v818, 0
        %v846 = vsel %vm143, %v839, 0
        %v849 = vsel %vm143, %v840, 0
        %v852 = vsel %vm143, %v841, 0
        %854 = vmatpush.bf16.msra.mxu0 0
        %855 = vmatpush.bf16.msra.mxu0 0
        %856 = vmatpush.bf16.msra.mxu0 0
        %857 = vmatpush.bf16.msra.mxu0 0
        %858 = vmatpush.bf16.msra.mxu0 0
        %859 = vmatpush.bf16.msra.mxu0 0
        %860 = vmatpush.bf16.msra.mxu0 0
        %861 = vmatpush.bf16.msra.mxu0 %v846
        %862 = vmatmul.bf16.gmra.mxu0 %v843
        %v863 = vpop.f32.mrf.mxu0
        %v864 = vadd.f32 0.0, %v863
        %v865 = vpop.f32.mrf.mxu0
        %866 = vdwg.mxu0
        %867 = vmatpush.bf16.msra.mxu0 0
        %868 = vmatpush.bf16.msra.mxu0 0
        %869 = vmatpush.bf16.msra.mxu0 0
        %870 = vmatpush.bf16.msra.mxu0 0
        %871 = vmatpush.bf16.msra.mxu0 0
        %872 = vmatpush.bf16.msra.mxu0 0
        %873 = vmatpush.bf16.msra.mxu0 0
        %874 = vmatpush.bf16.msra.mxu0 %v849
        %875 = vmatmul.bf16.gmra.mxu0 %v843
        %v876 = vpop.f32.mrf.mxu0
        %v877 = vadd.f32 0.0, %v876
        %v878 = vpop.f32.mrf.mxu0
        %879 = vdwg.mxu0
        %880 = vmatpush.bf16.msra.mxu0 0
        %881 = vmatpush.bf16.msra.mxu0 0
        %882 = vmatpush.bf16.msra.mxu0 0
        %883 = vmatpush.bf16.msra.mxu0 0
        %884 = vmatpush.bf16.msra.mxu0 0
        %885 = vmatpush.bf16.msra.mxu0 0
        %886 = vmatpush.bf16.msra.mxu0 0
        %887 = vmatpush.bf16.msra.mxu0 %v852
        %888 = vmatmul.bf16.gmra.mxu0 %v843
        %v889 = vpop.f32.mrf.mxu0
        %v890 = vadd.f32 0.0, %v889
        %v891 = vpop.f32.mrf.mxu0
        %892 = vdwg.mxu0
        %v893 = vadd.f32 %v814, %v864
        %v894 = vadd.f32 %v815, %v877
        %v895 = vadd.f32 %v816, %v890
        %s896 = scalar_lea.vmem %s1, 28
        %v897 = vld [vmem:[%s896] sm:$0xf]
        %v898 = vld [vmem:[#allocation2] sm:$0xff]
        %900 = vst [vmem:[#allocation1] ss:$4 sm:$0xff] %v898
        %v901 = vld.sshfl [vmem:[#allocation1] sm:$0xff pattern:$0x73625140]
        %v903 = vld.sshfl [vmem:[#allocation1 + $0x8] sm:$0xff pattern:$0x73625140]
        %v905 = vld.sshfl [vmem:[#allocation1 + $0x10] sm:$0xff pattern:$0x73625140]
        %v907 = vld.sshfl [vmem:[#allocation1 + $0x18] sm:$0xff pattern:$0x73625140]
        %909 = vrot.lane.b32.xlu0 %v901, 46
        %v910 = vpop.permute.xlu0 %909
        %911 = vrot.lane.b32.xlu0 %v903, 46
        %v912 = vpop.permute.xlu0 %911
        %913 = vrot.lane.b32.xlu0 %v905, 46
        %v914 = vpop.permute.xlu0 %913
        %915 = vrot.lane.b32.xlu0 %v907, 46
        %v916 = vpop.permute.xlu0 %915
        %vm917 = vcmask 375808
        %v918 = vsel %vm917, %v910, %v912
        %v919 = vsel %vm917, %v912, %v914
        %v920 = vsel %vm917, %v914, %v916
        %v922 = vsel %vm396, %v897, 0
        %v925 = vsel %vm143, %v918, 0
        %v928 = vsel %vm143, %v919, 0
        %v931 = vsel %vm143, %v920, 0
        %933 = vmatpush.bf16.msra.mxu0 0
        %934 = vmatpush.bf16.msra.mxu0 0
        %935 = vmatpush.bf16.msra.mxu0 0
        %936 = vmatpush.bf16.msra.mxu0 0
        %937 = vmatpush.bf16.msra.mxu0 0
        %938 = vmatpush.bf16.msra.mxu0 0
        %939 = vmatpush.bf16.msra.mxu0 0
        %940 = vmatpush.bf16.msra.mxu0 %v925
        %941 = vmatmul.bf16.gmra.mxu0 %v922
        %v942 = vpop.f32.mrf.mxu0
        %v943 = vadd.f32 0.0, %v942
        %v944 = vpop.f32.mrf.mxu0
        %945 = vdwg.mxu0
        %946 = vmatpush.bf16.msra.mxu0 0
        %947 = vmatpush.bf16.msra.mxu0 0
        %948 = vmatpush.bf16.msra.mxu0 0
        %949 = vmatpush.bf16.msra.mxu0 0
        %950 = vmatpush.bf16.msra.mxu0 0
        %951 = vmatpush.bf16.msra.mxu0 0
        %952 = vmatpush.bf16.msra.mxu0 0
        %953 = vmatpush.bf16.msra.mxu0 %v928
        %954 = vmatmul.bf16.gmra.mxu0 %v922
        %v955 = vpop.f32.mrf.mxu0
        %v956 = vadd.f32 0.0, %v955
        %v957 = vpop.f32.mrf.mxu0
        %958 = vdwg.mxu0
        %959 = vmatpush.bf16.msra.mxu0 0
        %960 = vmatpush.bf16.msra.mxu0 0
        %961 = vmatpush.bf16.msra.mxu0 0
        %962 = vmatpush.bf16.msra.mxu0 0
        %963 = vmatpush.bf16.msra.mxu0 0
        %964 = vmatpush.bf16.msra.mxu0 0
        %965 = vmatpush.bf16.msra.mxu0 0
        %966 = vmatpush.bf16.msra.mxu0 %v931
        %967 = vmatmul.bf16.gmra.mxu0 %v922
        %v968 = vpop.f32.mrf.mxu0
        %v969 = vadd.f32 0.0, %v968
        %v970 = vpop.f32.mrf.mxu0
        %971 = vdwg.mxu0
        %v972 = vadd.f32 %v893, %v943
        %v973 = vadd.f32 %v894, %v956
        %v974 = vadd.f32 %v895, %v969
        %s975 = scalar_lea.vmem %s1, 32
        %v976 = vld [vmem:[%s975] sm:$0xf]
        %v977 = vld [vmem:[#allocation2] sm:$0xff]
        %979 = vst [vmem:[#allocation1] ss:$4 sm:$0xff] %v977
        %v980 = vld.sshfl [vmem:[#allocation1] sm:$0xff pattern:$0x73625140]
        %v982 = vld.sshfl [vmem:[#allocation1 + $0x8] sm:$0xff pattern:$0x73625140]
        %v984 = vld.sshfl [vmem:[#allocation1 + $0x10] sm:$0xff pattern:$0x73625140]
        %v986 = vld.sshfl [vmem:[#allocation1 + $0x18] sm:$0xff pattern:$0x73625140]
        %988 = vrot.lane.b32.xlu0 %v980, 44
        %v989 = vpop.permute.xlu0 %988
        %990 = vrot.lane.b32.xlu0 %v982, 44
        %v991 = vpop.permute.xlu0 %990
        %992 = vrot.lane.b32.xlu0 %v984, 44
        %v993 = vpop.permute.xlu0 %992
        %994 = vrot.lane.b32.xlu0 %v986, 44
        %v995 = vpop.permute.xlu0 %994
        %vm996 = vcmask 359424
        %v997 = vsel %vm996, %v989, %v991
        %v998 = vsel %vm996, %v991, %v993
        %v999 = vsel %vm996, %v993, %v995
        %v1001 = vsel %vm396, %v976, 0
        %v1004 = vsel %vm143, %v997, 0
        %v1007 = vsel %vm143, %v998, 0
        %v1010 = vsel %vm143, %v999, 0
        %1012 = vmatpush.bf16.msra.mxu0 0
        %1013 = vmatpush.bf16.msra.mxu0 0
        %1014 = vmatpush.bf16.msra.mxu0 0
        %1015 = vmatpush.bf16.msra.mxu0 0
        %1016 = vmatpush.bf16.msra.mxu0 0
        %1017 = vmatpush.bf16.msra.mxu0 0
        %1018 = vmatpush.bf16.msra.mxu0 0
        %1019 = vmatpush.bf16.msra.mxu0 %v1004
        %1020 = vmatmul.bf16.gmra.mxu0 %v1001
        %v1021 = vpop.f32.mrf.mxu0
        %v1022 = vadd.f32 0.0, %v1021
        %v1023 = vpop.f32.mrf.mxu0
        %1024 = vdwg.mxu0
        %1025 = vmatpush.bf16.msra.mxu0 0
        %1026 = vmatpush.bf16.msra.mxu0 0
        %1027 = vmatpush.bf16.msra.mxu0 0
        %1028 = vmatpush.bf16.msra.mxu0 0
        %1029 = vmatpush.bf16.msra.mxu0 0
        %1030 = vmatpush.bf16.msra.mxu0 0
        %1031 = vmatpush.bf16.msra.mxu0 0
        %1032 = vmatpush.bf16.msra.mxu0 %v1007
        %1033 = vmatmul.bf16.gmra.mxu0 %v1001
        %v1034 = vpop.f32.mrf.mxu0
        %v1035 = vadd.f32 0.0, %v1034
        %v1036 = vpop.f32.mrf.mxu0
        %1037 = vdwg.mxu0
        %1038 = vmatpush.bf16.msra.mxu0 0
        %1039 = vmatpush.bf16.msra.mxu0 0
        %1040 = vmatpush.bf16.msra.mxu0 0
        %1041 = vmatpush.bf16.msra.mxu0 0
        %1042 = vmatpush.bf16.msra.mxu0 0
        %1043 = vmatpush.bf16.msra.mxu0 0
        %1044 = vmatpush.bf16.msra.mxu0 0
        %1045 = vmatpush.bf16.msra.mxu0 %v1010
        %1046 = vmatmul.bf16.gmra.mxu0 %v1001
        %v1047 = vpop.f32.mrf.mxu0
        %v1048 = vadd.f32 0.0, %v1047
        %v1049 = vpop.f32.mrf.mxu0
        %1050 = vdwg.mxu0
        %v1051 = vadd.f32 %v972, %v1022
        %v1052 = vadd.f32 %v973, %v1035
        %v1053 = vadd.f32 %v974, %v1048
        %1054 = vst [vmem:[#allocation3] sm:$0xff] %v1051
        %1055 = vst [vmem:[#allocation3 + $0x8] sm:$0xff] %v1052
        %1056 = vst [vmem:[#allocation3 + $0x10] sm:$0xff] %v1053
        %v1057 = vld [vmem:[#allocation3] sm:$0xff]
        %vm1058 = vcmp.gt.f32.partialorder %v1057, 0.0
        %v1059 = vmul.f32 %v1057, 0.2
        %v1060 = vsel %vm1058, %v1057, %v1059
        %v1062 = vrot.slane %v1060, 1
        %v1063 = vrot.slane %v1060, 2
        %v1064 = vrot.slane %v1060, 3
        %v1065 = vrot.slane %v1060, 4
        %v1066 = vrot.slane %v1060, 5
        %v1067 = vrot.slane %v1060, 6
        %v1068 = vrot.slane %v1060, 7
        %vm1076 = vcmask 122880
        %1077 = vst.msk [vmem:[%s136] sm:$0x1] %vm1076, %v1060
        %1078 = vst.msk [vmem:[%s136 + $0x10] sm:$0x1] %vm1076, %v1062
        %1079 = vst.msk [vmem:[%s136 + $0x20] sm:$0x1] %vm1076, %v1063
        %1080 = vst.msk [vmem:[%s136 + $0x30] sm:$0x1] %vm1076, %v1064
        %1081 = vst.msk [vmem:[%s136 + $0x40] sm:$0x1] %vm1076, %v1065
        %1082 = vst.msk [vmem:[%s136 + $0x50] sm:$0x1] %vm1076, %v1066
        %1083 = vst.msk [vmem:[%s136 + $0x60] sm:$0x1] %vm1076, %v1067
        %1084 = vst.msk [vmem:[%s136 + $0x70] sm:$0x1] %vm1076, %v1068
        %v1085 = vld [vmem:[#allocation3] sm:$0xff]
        %vm1086 = vcmp.gt.f32.partialorder %v1085, 0.0
        %v1087 = vmul.f32 %v1085, 0.2
        %v1088 = vsel %vm1086, %v1085, %v1087
        %v1090 = vrot.slane %v1088, 1
        %v1091 = vrot.slane %v1088, 2
        %v1092 = vrot.slane %v1088, 3
        %v1093 = vrot.slane %v1088, 4
        %v1094 = vrot.slane %v1088, 5
        %v1095 = vrot.slane %v1088, 6
        %v1096 = vrot.slane %v1088, 7
        %v1097 = vperm.slane %v1088, 0
        %v1098 = vperm.slane %v1090, 0
        %v1099 = vperm.slane %v1091, 0
        %v1100 = vperm.slane %v1092, 0
        %v1101 = vperm.slane %v1093, 0
        %v1102 = vperm.slane %v1094, 0
        %v1103 = vperm.slane %v1095, 0
        %v1104 = vperm.slane %v1096, 0
        %1105 = vrot.lane.b32.xlu0 %v1097, 108
        %v1106 = vpop.permute.xlu0 %1105
        %1107 = vrot.lane.b32.xlu0 %v1098, 108
        %v1108 = vpop.permute.xlu0 %1107
        %1109 = vrot.lane.b32.xlu0 %v1099, 108
        %v1110 = vpop.permute.xlu0 %1109
        %1111 = vrot.lane.b32.xlu0 %v1100, 108
        %v1112 = vpop.permute.xlu0 %1111
        %1113 = vrot.lane.b32.xlu0 %v1101, 108
        %v1114 = vpop.permute.xlu0 %1113
        %1115 = vrot.lane.b32.xlu0 %v1102, 108
        %v1116 = vpop.permute.xlu0 %1115
        %1117 = vrot.lane.b32.xlu0 %v1103, 108
        %v1118 = vpop.permute.xlu0 %1117
        %1119 = vrot.lane.b32.xlu0 %v1104, 108
        %v1120 = vpop.permute.xlu0 %1119
        %1129 = vst.msk [vmem:[%s136 + $0x1] sm:$0x1] %vm1076, %v1106
        %1130 = vst.msk [vmem:[%s136 + $0x11] sm:$0x1] %vm1076, %v1108
        %1131 = vst.msk [vmem:[%s136 + $0x21] sm:$0x1] %vm1076, %v1110
        %1132 = vst.msk [vmem:[%s136 + $0x31] sm:$0x1] %vm1076, %v1112
        %1133 = vst.msk [vmem:[%s136 + $0x41] sm:$0x1] %vm1076, %v1114
        %1134 = vst.msk [vmem:[%s136 + $0x51] sm:$0x1] %vm1076, %v1116
        %1135 = vst.msk [vmem:[%s136 + $0x61] sm:$0x1] %vm1076, %v1118
        %1136 = vst.msk [vmem:[%s136 + $0x71] sm:$0x1] %vm1076, %v1120
        %v1137 = vld [vmem:[#allocation3] sm:$0xff]
        %vm1138 = vcmp.gt.f32.partialorder %v1137, 0.0
        %v1139 = vmul.f32 %v1137, 0.2
        %v1140 = vsel %vm1138, %v1137, %v1139
        %v1142 = vrot.slane %v1140, 1
        %v1143 = vrot.slane %v1140, 2
        %v1144 = vrot.slane %v1140, 3
        %v1145 = vrot.slane %v1140, 4
        %v1146 = vrot.slane %v1140, 5
        %v1147 = vrot.slane %v1140, 6
        %v1148 = vrot.slane %v1140, 7
        %v1149 = vperm.slane %v1140, 0
        %v1150 = vperm.slane %v1142, 0
        %v1151 = vperm.slane %v1143, 0
        %v1152 = vperm.slane %v1144, 0
        %v1153 = vperm.slane %v1145, 0
        %v1154 = vperm.slane %v1146, 0
        %v1155 = vperm.slane %v1147, 0
        %v1156 = vperm.slane %v1148, 0
        %1157 = vrot.lane.b32.xlu0 %v1149, 88
        %v1158 = vpop.permute.xlu0 %1157
        %1159 = vrot.lane.b32.xlu0 %v1150, 88
        %v1160 = vpop.permute.xlu0 %1159
        %1161 = vrot.lane.b32.xlu0 %v1151, 88
        %v1162 = vpop.permute.xlu0 %1161
        %1163 = vrot.lane.b32.xlu0 %v1152, 88
        %v1164 = vpop.permute.xlu0 %1163
        %1165 = vrot.lane.b32.xlu0 %v1153, 88
        %v1166 = vpop.permute.xlu0 %1165
        %1167 = vrot.lane.b32.xlu0 %v1154, 88
        %v1168 = vpop.permute.xlu0 %1167
        %1169 = vrot.lane.b32.xlu0 %v1155, 88
        %v1170 = vpop.permute.xlu0 %1169
        %1171 = vrot.lane.b32.xlu0 %v1156, 88
        %v1172 = vpop.permute.xlu0 %1171
        %1181 = vst.msk [vmem:[%s136 + $0x2] sm:$0x1] %vm1076, %v1158
        %1182 = vst.msk [vmem:[%s136 + $0x12] sm:$0x1] %vm1076, %v1160
        %1183 = vst.msk [vmem:[%s136 + $0x22] sm:$0x1] %vm1076, %v1162
        %1184 = vst.msk [vmem:[%s136 + $0x32] sm:$0x1] %vm1076, %v1164
        %1185 = vst.msk [vmem:[%s136 + $0x42] sm:$0x1] %vm1076, %v1166
        %1186 = vst.msk [vmem:[%s136 + $0x52] sm:$0x1] %vm1076, %v1168
        %1187 = vst.msk [vmem:[%s136 + $0x62] sm:$0x1] %vm1076, %v1170
        %1188 = vst.msk [vmem:[%s136 + $0x72] sm:$0x1] %vm1076, %v1172
        %v1189 = vld [vmem:[#allocation3] sm:$0xff]
        %vm1190 = vcmp.gt.f32.partialorder %v1189, 0.0
        %v1191 = vmul.f32 %v1189, 0.2
        %v1192 = vsel %vm1190, %v1189, %v1191
        %v1194 = vrot.slane %v1192, 1
        %v1195 = vrot.slane %v1192, 2
        %v1196 = vrot.slane %v1192, 3
        %v1197 = vrot.slane %v1192, 4
        %v1198 = vrot.slane %v1192, 5
        %v1199 = vrot.slane %v1192, 6
        %v1200 = vrot.slane %v1192, 7
        %v1201 = vperm.slane %v1192, 0
        %v1202 = vperm.slane %v1194, 0
        %v1203 = vperm.slane %v1195, 0
        %v1204 = vperm.slane %v1196, 0
        %v1205 = vperm.slane %v1197, 0
        %v1206 = vperm.slane %v1198, 0
        %v1207 = vperm.slane %v1199, 0
        %v1208 = vperm.slane %v1200, 0
        %1209 = vrot.lane.b32.xlu0 %v1201, 68
        %v1210 = vpop.permute.xlu0 %1209
        %1211 = vrot.lane.b32.xlu0 %v1202, 68
        %v1212 = vpop.permute.xlu0 %1211
        %1213 = vrot.lane.b32.xlu0 %v1203, 68
        %v1214 = vpop.permute.xlu0 %1213
        %1215 = vrot.lane.b32.xlu0 %v1204, 68
        %v1216 = vpop.permute.xlu0 %1215
        %1217 = vrot.lane.b32.xlu0 %v1205, 68
        %v1218 = vpop.permute.xlu0 %1217
        %1219 = vrot.lane.b32.xlu0 %v1206, 68
        %v1220 = vpop.permute.xlu0 %1219
        %1221 = vrot.lane.b32.xlu0 %v1207, 68
        %v1222 = vpop.permute.xlu0 %1221
        %1223 = vrot.lane.b32.xlu0 %v1208, 68
        %v1224 = vpop.permute.xlu0 %1223
        %1233 = vst.msk [vmem:[%s136 + $0x3] sm:$0x1] %vm1076, %v1210
        %1234 = vst.msk [vmem:[%s136 + $0x13] sm:$0x1] %vm1076, %v1212
        %1235 = vst.msk [vmem:[%s136 + $0x23] sm:$0x1] %vm1076, %v1214
        %1236 = vst.msk [vmem:[%s136 + $0x33] sm:$0x1] %vm1076, %v1216
        %1237 = vst.msk [vmem:[%s136 + $0x43] sm:$0x1] %vm1076, %v1218
        %1238 = vst.msk [vmem:[%s136 + $0x53] sm:$0x1] %vm1076, %v1220
        %1239 = vst.msk [vmem:[%s136 + $0x63] sm:$0x1] %vm1076, %v1222
        %1240 = vst.msk [vmem:[%s136 + $0x73] sm:$0x1] %vm1076, %v1224
        %v1241 = vld [vmem:[#allocation3] sm:$0xff]
        %vm1242 = vcmp.gt.f32.partialorder %v1241, 0.0
        %v1243 = vmul.f32 %v1241, 0.2
        %v1244 = vsel %vm1242, %v1241, %v1243
        %v1246 = vrot.slane %v1244, 1
        %v1247 = vrot.slane %v1244, 2
        %v1248 = vrot.slane %v1244, 3
        %v1249 = vrot.slane %v1244, 4
        %v1250 = vrot.slane %v1244, 5
        %v1251 = vrot.slane %v1244, 6
        %v1252 = vrot.slane %v1244, 7
        %v1253 = vperm.slane %v1244, 0
        %v1254 = vperm.slane %v1246, 0
        %v1255 = vperm.slane %v1247, 0
        %v1256 = vperm.slane %v1248, 0
        %v1257 = vperm.slane %v1249, 0
        %v1258 = vperm.slane %v1250, 0
        %v1259 = vperm.slane %v1251, 0
        %v1260 = vperm.slane %v1252, 0
        %1261 = vrot.lane.b32.xlu0 %v1253, 48
        %v1262 = vpop.permute.xlu0 %1261
        %1263 = vrot.lane.b32.xlu0 %v1254, 48
        %v1264 = vpop.permute.xlu0 %1263
        %1265 = vrot.lane.b32.xlu0 %v1255, 48
        %v1266 = vpop.permute.xlu0 %1265
        %1267 = vrot.lane.b32.xlu0 %v1256, 48
        %v1268 = vpop.permute.xlu0 %1267
        %1269 = vrot.lane.b32.xlu0 %v1257, 48
        %v1270 = vpop.permute.xlu0 %1269
        %1271 = vrot.lane.b32.xlu0 %v1258, 48
        %v1272 = vpop.permute.xlu0 %1271
        %1273 = vrot.lane.b32.xlu0 %v1259, 48
        %v1274 = vpop.permute.xlu0 %1273
        %1275 = vrot.lane.b32.xlu0 %v1260, 48
        %v1276 = vpop.permute.xlu0 %1275
        %1285 = vst.msk [vmem:[%s136 + $0x4] sm:$0x1] %vm1076, %v1262
        %1286 = vst.msk [vmem:[%s136 + $0x14] sm:$0x1] %vm1076, %v1264
        %1287 = vst.msk [vmem:[%s136 + $0x24] sm:$0x1] %vm1076, %v1266
        %1288 = vst.msk [vmem:[%s136 + $0x34] sm:$0x1] %vm1076, %v1268
        %1289 = vst.msk [vmem:[%s136 + $0x44] sm:$0x1] %vm1076, %v1270
        %1290 = vst.msk [vmem:[%s136 + $0x54] sm:$0x1] %vm1076, %v1272
        %1291 = vst.msk [vmem:[%s136 + $0x64] sm:$0x1] %vm1076, %v1274
        %1292 = vst.msk [vmem:[%s136 + $0x74] sm:$0x1] %vm1076, %v1276
        %v1293 = vld [vmem:[#allocation3] sm:$0xff]
        %vm1294 = vcmp.gt.f32.partialorder %v1293, 0.0
        %v1295 = vmul.f32 %v1293, 0.2
        %v1296 = vsel %vm1294, %v1293, %v1295
        %v1298 = vrot.slane %v1296, 1
        %v1299 = vrot.slane %v1296, 2
        %v1300 = vrot.slane %v1296, 3
        %v1301 = vrot.slane %v1296, 4
        %v1302 = vrot.slane %v1296, 5
        %v1303 = vrot.slane %v1296, 6
        %v1304 = vrot.slane %v1296, 7
        %v1305 = vperm.slane %v1296, 0
        %v1306 = vperm.slane %v1298, 0
        %v1307 = vperm.slane %v1299, 0
        %v1308 = vperm.slane %v1300, 0
        %v1309 = vperm.slane %v1301, 0
        %v1310 = vperm.slane %v1302, 0
        %v1311 = vperm.slane %v1303, 0
        %v1312 = vperm.slane %v1304, 0
        %1313 = vrot.lane.b32.xlu0 %v1305, 28
        %v1314 = vpop.permute.xlu0 %1313
        %1315 = vrot.lane.b32.xlu0 %v1306, 28
        %v1316 = vpop.permute.xlu0 %1315
        %1317 = vrot.lane.b32.xlu0 %v1307, 28
        %v1318 = vpop.permute.xlu0 %1317
        %1319 = vrot.lane.b32.xlu0 %v1308, 28
        %v1320 = vpop.permute.xlu0 %1319
        %1321 = vrot.lane.b32.xlu0 %v1309, 28
        %v1322 = vpop.permute.xlu0 %1321
        %1323 = vrot.lane.b32.xlu0 %v1310, 28
        %v1324 = vpop.permute.xlu0 %1323
        %1325 = vrot.lane.b32.xlu0 %v1311, 28
        %v1326 = vpop.permute.xlu0 %1325
        %1327 = vrot.lane.b32.xlu0 %v1312, 28
        %v1328 = vpop.permute.xlu0 %1327
        %1337 = vst.msk [vmem:[%s136 + $0x5] sm:$0x1] %vm1076, %v1314
        %1338 = vst.msk [vmem:[%s136 + $0x15] sm:$0x1] %vm1076, %v1316
        %1339 = vst.msk [vmem:[%s136 + $0x25] sm:$0x1] %vm1076, %v1318
        %1340 = vst.msk [vmem:[%s136 + $0x35] sm:$0x1] %vm1076, %v1320
        %1341 = vst.msk [vmem:[%s136 + $0x45] sm:$0x1] %vm1076, %v1322
        %1342 = vst.msk [vmem:[%s136 + $0x55] sm:$0x1] %vm1076, %v1324
        %1343 = vst.msk [vmem:[%s136 + $0x65] sm:$0x1] %vm1076, %v1326
        %1344 = vst.msk [vmem:[%s136 + $0x75] sm:$0x1] %vm1076, %v1328
        %v1345 = vld [vmem:[#allocation3] sm:$0xff]
        %v1346 = vld [vmem:[#allocation3 + $0x8] sm:$0xff]
        %vm1347 = vcmp.gt.f32.partialorder %v1345, 0.0
        %vm1348 = vcmp.gt.f32.partialorder %v1346, 0.0
        %v1349 = vmul.f32 %v1345, 0.2
        %v1350 = vmul.f32 %v1346, 0.2
        %v1351 = vsel %vm1347, %v1345, %v1349
        %v1352 = vsel %vm1348, %v1346, %v1350
        %v1355 = vrot.slane %v1352, 7
        %vm1356 = vcmask 1040384
        %v1357 = vsel %vm1356, %v1351, %v1355
        %vm1358 = vcmask 1041409
        %v1359 = vsel %vm1358, %v1351, %v1355
        %v1360 = vrot.slane %v1359, 1
        %vm1361 = vcmask 1042434
        %v1362 = vsel %vm1361, %v1351, %v1355
        %v1363 = vrot.slane %v1362, 2
        %vm1364 = vcmask 1043459
        %v1365 = vsel %vm1364, %v1351, %v1355
        %v1366 = vrot.slane %v1365, 3
        %vm1367 = vcmask 1044484
        %v1368 = vsel %vm1367, %v1351, %v1355
        %v1369 = vrot.slane %v1368, 4
        %vm1370 = vcmask 1045509
        %v1371 = vsel %vm1370, %v1351, %v1355
        %v1372 = vrot.slane %v1371, 5
        %vm1373 = vcmask 1046534
        %v1374 = vsel %vm1373, %v1351, %v1355
        %v1375 = vrot.slane %v1374, 6
        %vm1376 = vcmask 1046528
        %v1377 = vsel %vm1376, %v1355, %v1351
        %v1378 = vrot.slane %v1377, 7
        %v1379 = vperm.slane %v1357, 0
        %v1380 = vperm.slane %v1357, 1
        %v1381 = vperm.slane %v1360, 0
        %v1382 = vperm.slane %v1360, 1
        %v1383 = vperm.slane %v1363, 0
        %v1384 = vperm.slane %v1363, 1
        %v1385 = vperm.slane %v1366, 0
        %v1386 = vperm.slane %v1366, 1
        %v1387 = vperm.slane %v1369, 0
        %v1388 = vperm.slane %v1369, 1
        %v1389 = vperm.slane %v1372, 0
        %v1390 = vperm.slane %v1372, 1
        %v1391 = vperm.slane %v1375, 0
        %v1392 = vperm.slane %v1375, 1
        %v1393 = vperm.slane %v1378, 0
        %v1394 = vperm.slane %v1378, 1
        %1395 = vrot.lane.b32.xlu0 %v1379, 8
        %v1396 = vpop.permute.xlu0 %1395
        %1397 = vrot.lane.b32.xlu0 %v1380, 8
        %v1398 = vpop.permute.xlu0 %1397
        %1399 = vrot.lane.b32.xlu0 %v1381, 8
        %v1400 = vpop.permute.xlu0 %1399
        %1401 = vrot.lane.b32.xlu0 %v1382, 8
        %v1402 = vpop.permute.xlu0 %1401
        %1403 = vrot.lane.b32.xlu0 %v1383, 8
        %v1404 = vpop.permute.xlu0 %1403
        %1405 = vrot.lane.b32.xlu0 %v1384, 8
        %v1406 = vpop.permute.xlu0 %1405
        %1407 = vrot.lane.b32.xlu0 %v1385, 8
        %v1408 = vpop.permute.xlu0 %1407
        %1409 = vrot.lane.b32.xlu0 %v1386, 8
        %v1410 = vpop.permute.xlu0 %1409
        %1411 = vrot.lane.b32.xlu0 %v1387, 8
        %v1412 = vpop.permute.xlu0 %1411
        %1413 = vrot.lane.b32.xlu0 %v1388, 8
        %v1414 = vpop.permute.xlu0 %1413
        %1415 = vrot.lane.b32.xlu0 %v1389, 8
        %v1416 = vpop.permute.xlu0 %1415
        %1417 = vrot.lane.b32.xlu0 %v1390, 8
        %v1418 = vpop.permute.xlu0 %1417
        %1419 = vrot.lane.b32.xlu0 %v1391, 8
        %v1420 = vpop.permute.xlu0 %1419
        %1421 = vrot.lane.b32.xlu0 %v1392, 8
        %v1422 = vpop.permute.xlu0 %1421
        %1423 = vrot.lane.b32.xlu0 %v1393, 8
        %v1424 = vpop.permute.xlu0 %1423
        %1425 = vrot.lane.b32.xlu0 %v1394, 8
        %v1426 = vpop.permute.xlu0 %1425
        %vm1427 = vcmask 64512
        %v1428 = vsel %vm1427, %v1396, %v1398
        %v1429 = vsel %vm1427, %v1400, %v1402
        %v1430 = vsel %vm1427, %v1404, %v1406
        %v1431 = vsel %vm1427, %v1408, %v1410
        %v1432 = vsel %vm1427, %v1412, %v1414
        %v1433 = vsel %vm1427, %v1416, %v1418
        %v1434 = vsel %vm1427, %v1420, %v1422
        %v1435 = vsel %vm1427, %v1424, %v1426
        %1444 = vst.msk [vmem:[%s136 + $0x6] sm:$0x1] %vm1076, %v1428
        %1445 = vst.msk [vmem:[%s136 + $0x16] sm:$0x1] %vm1076, %v1429
        %1446 = vst.msk [vmem:[%s136 + $0x26] sm:$0x1] %vm1076, %v1430
        %1447 = vst.msk [vmem:[%s136 + $0x36] sm:$0x1] %vm1076, %v1431
        %1448 = vst.msk [vmem:[%s136 + $0x46] sm:$0x1] %vm1076, %v1432
        %1449 = vst.msk [vmem:[%s136 + $0x56] sm:$0x1] %vm1076, %v1433
        %1450 = vst.msk [vmem:[%s136 + $0x66] sm:$0x1] %vm1076, %v1434
        %1451 = vst.msk [vmem:[%s136 + $0x76] sm:$0x1] %vm1076, %v1435
        %v1452 = vld [vmem:[#allocation3 + $0x8] sm:$0xff]
        %vm1453 = vcmp.gt.f32.partialorder %v1452, 0.0
        %v1454 = vmul.f32 %v1452, 0.2
        %v1455 = vsel %vm1453, %v1452, %v1454
        %v1457 = vrot.slane %v1455, 1
        %v1458 = vrot.slane %v1455, 2
        %v1459 = vrot.slane %v1455, 3
        %v1460 = vrot.slane %v1455, 4
        %v1461 = vrot.slane %v1455, 5
        %v1462 = vrot.slane %v1455, 6
        %v1463 = vrot.slane %v1455, 7
        %v1464 = vperm.slane %v1455, 0
        %v1465 = vperm.slane %v1457, 0
        %v1466 = vperm.slane %v1458, 0
        %v1467 = vperm.slane %v1459, 0
        %v1468 = vperm.slane %v1460, 0
        %v1469 = vperm.slane %v1461, 0
        %v1470 = vperm.slane %v1462, 0
        %v1471 = vperm.slane %v1463, 0
        %1472 = vrot.lane.b32.xlu0 %v1464, 116
        %v1473 = vpop.permute.xlu0 %1472
        %1474 = vrot.lane.b32.xlu0 %v1465, 116
        %v1475 = vpop.permute.xlu0 %1474
        %1476 = vrot.lane.b32.xlu0 %v1466, 116
        %v1477 = vpop.permute.xlu0 %1476
        %1478 = vrot.lane.b32.xlu0 %v1467, 116
        %v1479 = vpop.permute.xlu0 %1478
        %1480 = vrot.lane.b32.xlu0 %v1468, 116
        %v1481 = vpop.permute.xlu0 %1480
        %1482 = vrot.lane.b32.xlu0 %v1469, 116
        %v1483 = vpop.permute.xlu0 %1482
        %1484 = vrot.lane.b32.xlu0 %v1470, 116
        %v1485 = vpop.permute.xlu0 %1484
        %1486 = vrot.lane.b32.xlu0 %v1471, 116
        %v1487 = vpop.permute.xlu0 %1486
        %1496 = vst.msk [vmem:[%s136 + $0x7] sm:$0x1] %vm1076, %v1473
        %1497 = vst.msk [vmem:[%s136 + $0x17] sm:$0x1] %vm1076, %v1475
        %1498 = vst.msk [vmem:[%s136 + $0x27] sm:$0x1] %vm1076, %v1477
        %1499 = vst.msk [vmem:[%s136 + $0x37] sm:$0x1] %vm1076, %v1479
        %1500 = vst.msk [vmem:[%s136 + $0x47] sm:$0x1] %vm1076, %v1481
        %1501 = vst.msk [vmem:[%s136 + $0x57] sm:$0x1] %vm1076, %v1483
        %1502 = vst.msk [vmem:[%s136 + $0x67] sm:$0x1] %vm1076, %v1485
        %1503 = vst.msk [vmem:[%s136 + $0x77] sm:$0x1] %vm1076, %v1487
        %v1504 = vld [vmem:[#allocation3 + $0x8] sm:$0xff]
        %vm1505 = vcmp.gt.f32.partialorder %v1504, 0.0
        %v1506 = vmul.f32 %v1504, 0.2
        %v1507 = vsel %vm1505, %v1504, %v1506
        %v1509 = vrot.slane %v1507, 1
        %v1510 = vrot.slane %v1507, 2
        %v1511 = vrot.slane %v1507, 3
        %v1512 = vrot.slane %v1507, 4
        %v1513 = vrot.slane %v1507, 5
        %v1514 = vrot.slane %v1507, 6
        %v1515 = vrot.slane %v1507, 7
        %v1516 = vperm.slane %v1507, 0
        %v1517 = vperm.slane %v1509, 0
        %v1518 = vperm.slane %v1510, 0
        %v1519 = vperm.slane %v1511, 0
        %v1520 = vperm.slane %v1512, 0
        %v1521 = vperm.slane %v1513, 0
        %v1522 = vperm.slane %v1514, 0
        %v1523 = vperm.slane %v1515, 0
        %1524 = vrot.lane.b32.xlu0 %v1516, 96
        %v1525 = vpop.permute.xlu0 %1524
        %1526 = vrot.lane.b32.xlu0 %v1517, 96
        %v1527 = vpop.permute.xlu0 %1526
        %1528 = vrot.lane.b32.xlu0 %v1518, 96
        %v1529 = vpop.permute.xlu0 %1528
        %1530 = vrot.lane.b32.xlu0 %v1519, 96
        %v1531 = vpop.permute.xlu0 %1530
        %1532 = vrot.lane.b32.xlu0 %v1520, 96
        %v1533 = vpop.permute.xlu0 %1532
        %1534 = vrot.lane.b32.xlu0 %v1521, 96
        %v1535 = vpop.permute.xlu0 %1534
        %1536 = vrot.lane.b32.xlu0 %v1522, 96
        %v1537 = vpop.permute.xlu0 %1536
        %1538 = vrot.lane.b32.xlu0 %v1523, 96
        %v1539 = vpop.permute.xlu0 %1538
        %1548 = vst.msk [vmem:[%s136 + $0x8] sm:$0x1] %vm1076, %v1525
        %1549 = vst.msk [vmem:[%s136 + $0x18] sm:$0x1] %vm1076, %v1527
        %1550 = vst.msk [vmem:[%s136 + $0x28] sm:$0x1] %vm1076, %v1529
        %1551 = vst.msk [vmem:[%s136 + $0x38] sm:$0x1] %vm1076, %v1531
        %1552 = vst.msk [vmem:[%s136 + $0x48] sm:$0x1] %vm1076, %v1533
        %1553 = vst.msk [vmem:[%s136 + $0x58] sm:$0x1] %vm1076, %v1535
        %1554 = vst.msk [vmem:[%s136 + $0x68] sm:$0x1] %vm1076, %v1537
        %1555 = vst.msk [vmem:[%s136 + $0x78] sm:$0x1] %vm1076, %v1539
        %v1556 = vld [vmem:[#allocation3 + $0x8] sm:$0xff]
        %vm1557 = vcmp.gt.f32.partialorder %v1556, 0.0
        %v1558 = vmul.f32 %v1556, 0.2
        %v1559 = vsel %vm1557, %v1556, %v1558
        %v1561 = vrot.slane %v1559, 1
        %v1562 = vrot.slane %v1559, 2
        %v1563 = vrot.slane %v1559, 3
        %v1564 = vrot.slane %v1559, 4
        %v1565 = vrot.slane %v1559, 5
        %v1566 = vrot.slane %v1559, 6
        %v1567 = vrot.slane %v1559, 7
        %v1568 = vperm.slane %v1559, 0
        %v1569 = vperm.slane %v1561, 0
        %v1570 = vperm.slane %v1562, 0
        %v1571 = vperm.slane %v1563, 0
        %v1572 = vperm.slane %v1564, 0
        %v1573 = vperm.slane %v1565, 0
        %v1574 = vperm.slane %v1566, 0
        %v1575 = vperm.slane %v1567, 0
        %1576 = vrot.lane.b32.xlu0 %v1568, 76
        %v1577 = vpop.permute.xlu0 %1576
        %1578 = vrot.lane.b32.xlu0 %v1569, 76
        %v1579 = vpop.permute.xlu0 %1578
        %1580 = vrot.lane.b32.xlu0 %v1570, 76
        %v1581 = vpop.permute.xlu0 %1580
        %1582 = vrot.lane.b32.xlu0 %v1571, 76
        %v1583 = vpop.permute.xlu0 %1582
        %1584 = vrot.lane.b32.xlu0 %v1572, 76
        %v1585 = vpop.permute.xlu0 %1584
        %1586 = vrot.lane.b32.xlu0 %v1573, 76
        %v1587 = vpop.permute.xlu0 %1586
        %1588 = vrot.lane.b32.xlu0 %v1574, 76
        %v1589 = vpop.permute.xlu0 %1588
        %1590 = vrot.lane.b32.xlu0 %v1575, 76
        %v1591 = vpop.permute.xlu0 %1590
        %1600 = vst.msk [vmem:[%s136 + $0x9] sm:$0x1] %vm1076, %v1577
        %1601 = vst.msk [vmem:[%s136 + $0x19] sm:$0x1] %vm1076, %v1579
        %1602 = vst.msk [vmem:[%s136 + $0x29] sm:$0x1] %vm1076, %v1581
        %1603 = vst.msk [vmem:[%s136 + $0x39] sm:$0x1] %vm1076, %v1583
        %1604 = vst.msk [vmem:[%s136 + $0x49] sm:$0x1] %vm1076, %v1585
        %1605 = vst.msk [vmem:[%s136 + $0x59] sm:$0x1] %vm1076, %v1587
        %1606 = vst.msk [vmem:[%s136 + $0x69] sm:$0x1] %vm1076, %v1589
        %1607 = vst.msk [vmem:[%s136 + $0x79] sm:$0x1] %vm1076, %v1591
        %v1608 = vld [vmem:[#allocation3 + $0x8] sm:$0xff]
        %vm1609 = vcmp.gt.f32.partialorder %v1608, 0.0
        %v1610 = vmul.f32 %v1608, 0.2
        %v1611 = vsel %vm1609, %v1608, %v1610
        %v1613 = vrot.slane %v1611, 1
        %v1614 = vrot.slane %v1611, 2
        %v1615 = vrot.slane %v1611, 3
        %v1616 = vrot.slane %v1611, 4
        %v1617 = vrot.slane %v1611, 5
        %v1618 = vrot.slane %v1611, 6
        %v1619 = vrot.slane %v1611, 7
        %v1620 = vperm.slane %v1611, 0
        %v1621 = vperm.slane %v1613, 0
        %v1622 = vperm.slane %v1614, 0
        %v1623 = vperm.slane %v1615, 0
        %v1624 = vperm.slane %v1616, 0
        %v1625 = vperm.slane %v1617, 0
        %v1626 = vperm.slane %v1618, 0
        %v1627 = vperm.slane %v1619, 0
        %1628 = vrot.lane.b32.xlu0 %v1620, 56
        %v1629 = vpop.permute.xlu0 %1628
        %1630 = vrot.lane.b32.xlu0 %v1621, 56
        %v1631 = vpop.permute.xlu0 %1630
        %1632 = vrot.lane.b32.xlu0 %v1622, 56
        %v1633 = vpop.permute.xlu0 %1632
        %1634 = vrot.lane.b32.xlu0 %v1623, 56
        %v1635 = vpop.permute.xlu0 %1634
        %1636 = vrot.lane.b32.xlu0 %v1624, 56
        %v1637 = vpop.permute.xlu0 %1636
        %1638 = vrot.lane.b32.xlu0 %v1625, 56
        %v1639 = vpop.permute.xlu0 %1638
        %1640 = vrot.lane.b32.xlu0 %v1626, 56
        %v1641 = vpop.permute.xlu0 %1640
        %1642 = vrot.lane.b32.xlu0 %v1627, 56
        %v1643 = vpop.permute.xlu0 %1642
        %1652 = vst.msk [vmem:[%s136 + $0xa] sm:$0x1] %vm1076, %v1629
        %1653 = vst.msk [vmem:[%s136 + $0x1a] sm:$0x1] %vm1076, %v1631
        %1654 = vst.msk [vmem:[%s136 + $0x2a] sm:$0x1] %vm1076, %v1633
        %1655 = vst.msk [vmem:[%s136 + $0x3a] sm:$0x1] %vm1076, %v1635
        %1656 = vst.msk [vmem:[%s136 + $0x4a] sm:$0x1] %vm1076, %v1637
        %1657 = vst.msk [vmem:[%s136 + $0x5a] sm:$0x1] %vm1076, %v1639
        %1658 = vst.msk [vmem:[%s136 + $0x6a] sm:$0x1] %vm1076, %v1641
        %1659 = vst.msk [vmem:[%s136 + $0x7a] sm:$0x1] %vm1076, %v1643
        %v1660 = vld [vmem:[#allocation3 + $0x8] sm:$0xff]
        %vm1661 = vcmp.gt.f32.partialorder %v1660, 0.0
        %v1662 = vmul.f32 %v1660, 0.2
        %v1663 = vsel %vm1661, %v1660, %v1662
        %v1665 = vrot.slane %v1663, 1
        %v1666 = vrot.slane %v1663, 2
        %v1667 = vrot.slane %v1663, 3
        %v1668 = vrot.slane %v1663, 4
        %v1669 = vrot.slane %v1663, 5
        %v1670 = vrot.slane %v1663, 6
        %v1671 = vrot.slane %v1663, 7
        %v1672 = vperm.slane %v1663, 0
        %v1673 = vperm.slane %v1665, 0
        %v1674 = vperm.slane %v1666, 0
        %v1675 = vperm.slane %v1667, 0
        %v1676 = vperm.slane %v1668, 0
        %v1677 = vperm.slane %v1669, 0
        %v1678 = vperm.slane %v1670, 0
        %v1679 = vperm.slane %v1671, 0
        %1680 = vrot.lane.b32.xlu0 %v1672, 36
        %v1681 = vpop.permute.xlu0 %1680
        %1682 = vrot.lane.b32.xlu0 %v1673, 36
        %v1683 = vpop.permute.xlu0 %1682
        %1684 = vrot.lane.b32.xlu0 %v1674, 36
        %v1685 = vpop.permute.xlu0 %1684
        %1686 = vrot.lane.b32.xlu0 %v1675, 36
        %v1687 = vpop.permute.xlu0 %1686
        %1688 = vrot.lane.b32.xlu0 %v1676, 36
        %v1689 = vpop.permute.xlu0 %1688
        %1690 = vrot.lane.b32.xlu0 %v1677, 36
        %v1691 = vpop.permute.xlu0 %1690
        %1692 = vrot.lane.b32.xlu0 %v1678, 36
        %v1693 = vpop.permute.xlu0 %1692
        %1694 = vrot.lane.b32.xlu0 %v1679, 36
        %v1695 = vpop.permute.xlu0 %1694
        %1704 = vst.msk [vmem:[%s136 + $0xb] sm:$0x1] %vm1076, %v1681
        %1705 = vst.msk [vmem:[%s136 + $0x1b] sm:$0x1] %vm1076, %v1683
        %1706 = vst.msk [vmem:[%s136 + $0x2b] sm:$0x1] %vm1076, %v1685
        %1707 = vst.msk [vmem:[%s136 + $0x3b] sm:$0x1] %vm1076, %v1687
        %1708 = vst.msk [vmem:[%s136 + $0x4b] sm:$0x1] %vm1076, %v1689
        %1709 = vst.msk [vmem:[%s136 + $0x5b] sm:$0x1] %vm1076, %v1691
        %1710 = vst.msk [vmem:[%s136 + $0x6b] sm:$0x1] %vm1076, %v1693
        %1711 = vst.msk [vmem:[%s136 + $0x7b] sm:$0x1] %vm1076, %v1695
        %v1712 = vld [vmem:[#allocation3 + $0x8] sm:$0xff]
        %vm1713 = vcmp.gt.f32.partialorder %v1712, 0.0
        %v1714 = vmul.f32 %v1712, 0.2
        %v1715 = vsel %vm1713, %v1712, %v1714
        %v1717 = vrot.slane %v1715, 1
        %v1718 = vrot.slane %v1715, 2
        %v1719 = vrot.slane %v1715, 3
        %v1720 = vrot.slane %v1715, 4
        %v1721 = vrot.slane %v1715, 5
        %v1722 = vrot.slane %v1715, 6
        %v1723 = vrot.slane %v1715, 7
        %v1724 = vperm.slane %v1715, 0
        %v1725 = vperm.slane %v1717, 0
        %v1726 = vperm.slane %v1718, 0
        %v1727 = vperm.slane %v1719, 0
        %v1728 = vperm.slane %v1720, 0
        %v1729 = vperm.slane %v1721, 0
        %v1730 = vperm.slane %v1722, 0
        %v1731 = vperm.slane %v1723, 0
        %1732 = vrot.lane.b32.xlu0 %v1724, 16
        %v1733 = vpop.permute.xlu0 %1732
        %1734 = vrot.lane.b32.xlu0 %v1725, 16
        %v1735 = vpop.permute.xlu0 %1734
        %1736 = vrot.lane.b32.xlu0 %v1726, 16
        %v1737 = vpop.permute.xlu0 %1736
        %1738 = vrot.lane.b32.xlu0 %v1727, 16
        %v1739 = vpop.permute.xlu0 %1738
        %1740 = vrot.lane.b32.xlu0 %v1728, 16
        %v1741 = vpop.permute.xlu0 %1740
        %1742 = vrot.lane.b32.xlu0 %v1729, 16
        %v1743 = vpop.permute.xlu0 %1742
        %1744 = vrot.lane.b32.xlu0 %v1730, 16
        %v1745 = vpop.permute.xlu0 %1744
        %1746 = vrot.lane.b32.xlu0 %v1731, 16
        %v1747 = vpop.permute.xlu0 %1746
        %1756 = vst.msk [vmem:[%s136 + $0xc] sm:$0x1] %vm1076, %v1733
        %1757 = vst.msk [vmem:[%s136 + $0x1c] sm:$0x1] %vm1076, %v1735
        %1758 = vst.msk [vmem:[%s136 + $0x2c] sm:$0x1] %vm1076, %v1737
        %1759 = vst.msk [vmem:[%s136 + $0x3c] sm:$0x1] %vm1076, %v1739
        %1760 = vst.msk [vmem:[%s136 + $0x4c] sm:$0x1] %vm1076, %v1741
        %1761 = vst.msk [vmem:[%s136 + $0x5c] sm:$0x1] %vm1076, %v1743
        %1762 = vst.msk [vmem:[%s136 + $0x6c] sm:$0x1] %vm1076, %v1745
        %1763 = vst.msk [vmem:[%s136 + $0x7c] sm:$0x1] %vm1076, %v1747
        %v1764 = vld [vmem:[#allocation3 + $0x10] sm:$0xff]
        %vm1765 = vcmp.gt.f32.partialorder %v1764, 0.0
        %v1766 = vmul.f32 %v1764, 0.2
        %v1767 = vsel %vm1765, %v1764, %v1766
        %v1769 = vrot.slane %v1767, 1
        %v1770 = vrot.slane %v1767, 2
        %v1771 = vrot.slane %v1767, 3
        %v1772 = vrot.slane %v1767, 4
        %v1773 = vrot.slane %v1767, 5
        %v1774 = vrot.slane %v1767, 6
        %v1775 = vrot.slane %v1767, 7
        %v1776 = vperm.slane %v1767, 0
        %v1777 = vperm.slane %v1769, 0
        %v1778 = vperm.slane %v1770, 0
        %v1779 = vperm.slane %v1771, 0
        %v1780 = vperm.slane %v1772, 0
        %v1781 = vperm.slane %v1773, 0
        %v1782 = vperm.slane %v1774, 0
        %v1783 = vperm.slane %v1775, 0
        %1784 = vrot.lane.b32.xlu0 %v1776, 124
        %v1785 = vpop.permute.xlu0 %1784
        %1786 = vrot.lane.b32.xlu0 %v1777, 124
        %v1787 = vpop.permute.xlu0 %1786
        %1788 = vrot.lane.b32.xlu0 %v1778, 124
        %v1789 = vpop.permute.xlu0 %1788
        %1790 = vrot.lane.b32.xlu0 %v1779, 124
        %v1791 = vpop.permute.xlu0 %1790
        %1792 = vrot.lane.b32.xlu0 %v1780, 124
        %v1793 = vpop.permute.xlu0 %1792
        %1794 = vrot.lane.b32.xlu0 %v1781, 124
        %v1795 = vpop.permute.xlu0 %1794
        %1796 = vrot.lane.b32.xlu0 %v1782, 124
        %v1797 = vpop.permute.xlu0 %1796
        %1798 = vrot.lane.b32.xlu0 %v1783, 124
        %v1799 = vpop.permute.xlu0 %1798
        %1808 = vst.msk [vmem:[%s136 + $0xd] sm:$0x1] %vm1076, %v1785
        %1809 = vst.msk [vmem:[%s136 + $0x1d] sm:$0x1] %vm1076, %v1787
        %1810 = vst.msk [vmem:[%s136 + $0x2d] sm:$0x1] %vm1076, %v1789
        %1811 = vst.msk [vmem:[%s136 + $0x3d] sm:$0x1] %vm1076, %v1791
        %1812 = vst.msk [vmem:[%s136 + $0x4d] sm:$0x1] %vm1076, %v1793
        %1813 = vst.msk [vmem:[%s136 + $0x5d] sm:$0x1] %vm1076, %v1795
        %1814 = vst.msk [vmem:[%s136 + $0x6d] sm:$0x1] %vm1076, %v1797
        %1815 = vst.msk [vmem:[%s136 + $0x7d] sm:$0x1] %vm1076, %v1799
        %v1816 = vld [vmem:[#allocation3 + $0x10] sm:$0xff]
        %vm1817 = vcmp.gt.f32.partialorder %v1816, 0.0
        %v1818 = vmul.f32 %v1816, 0.2
        %v1819 = vsel %vm1817, %v1816, %v1818
        %v1821 = vrot.slane %v1819, 1
        %v1822 = vrot.slane %v1819, 2
        %v1823 = vrot.slane %v1819, 3
        %v1824 = vrot.slane %v1819, 4
        %v1825 = vrot.slane %v1819, 5
        %v1826 = vrot.slane %v1819, 6
        %v1827 = vrot.slane %v1819, 7
        %v1828 = vperm.slane %v1819, 0
        %v1829 = vperm.slane %v1821, 0
        %v1830 = vperm.slane %v1822, 0
        %v1831 = vperm.slane %v1823, 0
        %v1832 = vperm.slane %v1824, 0
        %v1833 = vperm.slane %v1825, 0
        %v1834 = vperm.slane %v1826, 0
        %v1835 = vperm.slane %v1827, 0
        %1836 = vrot.lane.b32.xlu0 %v1828, 104
        %v1837 = vpop.permute.xlu0 %1836
        %1838 = vrot.lane.b32.xlu0 %v1829, 104
        %v1839 = vpop.permute.xlu0 %1838
        %1840 = vrot.lane.b32.xlu0 %v1830, 104
        %v1841 = vpop.permute.xlu0 %1840
        %1842 = vrot.lane.b32.xlu0 %v1831, 104
        %v1843 = vpop.permute.xlu0 %1842
        %1844 = vrot.lane.b32.xlu0 %v1832, 104
        %v1845 = vpop.permute.xlu0 %1844
        %1846 = vrot.lane.b32.xlu0 %v1833, 104
        %v1847 = vpop.permute.xlu0 %1846
        %1848 = vrot.lane.b32.xlu0 %v1834, 104
        %v1849 = vpop.permute.xlu0 %1848
        %1850 = vrot.lane.b32.xlu0 %v1835, 104
        %v1851 = vpop.permute.xlu0 %1850
        %1860 = vst.msk [vmem:[%s136 + $0xe] sm:$0x1] %vm1076, %v1837
        %1861 = vst.msk [vmem:[%s136 + $0x1e] sm:$0x1] %vm1076, %v1839
        %1862 = vst.msk [vmem:[%s136 + $0x2e] sm:$0x1] %vm1076, %v1841
        %1863 = vst.msk [vmem:[%s136 + $0x3e] sm:$0x1] %vm1076, %v1843
        %1864 = vst.msk [vmem:[%s136 + $0x4e] sm:$0x1] %vm1076, %v1845
        %1865 = vst.msk [vmem:[%s136 + $0x5e] sm:$0x1] %vm1076, %v1847
        %1866 = vst.msk [vmem:[%s136 + $0x6e] sm:$0x1] %vm1076, %v1849
        %1867 = vst.msk [vmem:[%s136 + $0x7e] sm:$0x1] %vm1076, %v1851
        %v1868 = vld [vmem:[#allocation3 + $0x10] sm:$0xff]
        %vm1869 = vcmp.gt.f32.partialorder %v1868, 0.0
        %v1870 = vmul.f32 %v1868, 0.2
        %v1871 = vsel %vm1869, %v1868, %v1870
        %v1873 = vrot.slane %v1871, 1
        %v1874 = vrot.slane %v1871, 2
        %v1875 = vrot.slane %v1871, 3
        %v1876 = vrot.slane %v1871, 4
        %v1877 = vrot.slane %v1871, 5
        %v1878 = vrot.slane %v1871, 6
        %v1879 = vrot.slane %v1871, 7
        %v1880 = vperm.slane %v1871, 0
        %v1881 = vperm.slane %v1873, 0
        %v1882 = vperm.slane %v1874, 0
        %v1883 = vperm.slane %v1875, 0
        %v1884 = vperm.slane %v1876, 0
        %v1885 = vperm.slane %v1877, 0
        %v1886 = vperm.slane %v1878, 0
        %v1887 = vperm.slane %v1879, 0
        %1888 = vrot.lane.b32.xlu0 %v1880, 84
        %v1889 = vpop.permute.xlu0 %1888
        %1890 = vrot.lane.b32.xlu0 %v1881, 84
        %v1891 = vpop.permute.xlu0 %1890
        %1892 = vrot.lane.b32.xlu0 %v1882, 84
        %v1893 = vpop.permute.xlu0 %1892
        %1894 = vrot.lane.b32.xlu0 %v1883, 84
        %v1895 = vpop.permute.xlu0 %1894
        %1896 = vrot.lane.b32.xlu0 %v1884, 84
        %v1897 = vpop.permute.xlu0 %1896
        %1898 = vrot.lane.b32.xlu0 %v1885, 84
        %v1899 = vpop.permute.xlu0 %1898
        %1900 = vrot.lane.b32.xlu0 %v1886, 84
        %v1901 = vpop.permute.xlu0 %1900
        %1902 = vrot.lane.b32.xlu0 %v1887, 84
        %v1903 = vpop.permute.xlu0 %1902
        %1912 = vst.msk [vmem:[%s136 + $0xf] sm:$0x1] %vm1076, %v1889
        %1913 = vst.msk [vmem:[%s136 + $0x1f] sm:$0x1] %vm1076, %v1891
        %1914 = vst.msk [vmem:[%s136 + $0x2f] sm:$0x1] %vm1076, %v1893
        %1915 = vst.msk [vmem:[%s136 + $0x3f] sm:$0x1] %vm1076, %v1895
        %1916 = vst.msk [vmem:[%s136 + $0x4f] sm:$0x1] %vm1076, %v1897
        %1917 = vst.msk [vmem:[%s136 + $0x5f] sm:$0x1] %vm1076, %v1899
        %1918 = vst.msk [vmem:[%s136 + $0x6f] sm:$0x1] %vm1076, %v1901
        %1919 = vst.msk [vmem:[%s136 + $0x7f] sm:$0x1] %vm1076, %v1903
        %s1920 = sand.u32 %s71, 1
        %s1921 = scalar_lea.sflag [#allocation5], %s1920
        %s1922 = sand.u32 %s71, 1
        %s1923 = smul.addr %s1922, 128
        %s1924 = scalar_lea.vmem [#allocation4], %s1923
        // Predicated region
        $region29: #{tpu_custom_call.1} parent=27 // pred_check
          %p1925 = pneg %p81
        $region30: #{tpu_custom_call.1} parent=27 // pred_check_branch
          %1927 = sbr.rel (%p1925) target = $region32
        $region31: #{tpu_custom_call.1} parent=27 // pred_region
          %1929 = vsyncadd %s1921, 0
          %s1930 = smul.addr %s16, 16
          %s1931 = smul.addr %s1930, 8
          %s1932 = scalar_lea.hbm %s2, %s1931
          %s1933 = sshll.u32 %s1924, 4
          %s1934 = int_to_ptr.vmem [resolvable:$true] %s1933
          %s1935 = sshll.u32 %s1932, 4
          %s1936 = int_to_ptr.hbm [resolvable:$true] %s1935
          %1941 = dma.vmem_to_hbm [thread:$0]  %s1934, 2048, %s1936, %s1921, 128, 128, 8
        $region32: #{tpu_custom_call.1} parent=27 // pred_fallthru
          _
      $region28: #{tpu_custom_call.1} parent=5 // pred_fallthru
        _
      %p1942 = scmp.le.s32.totalorder 2, %s11
      // Predicated region
      $region33: #{tpu_custom_call.1} parent=5 // pred_check
        %p1943 = pneg %p1942
      $region34: #{tpu_custom_call.1} parent=5 // pred_check_branch
        %1945 = sbr.rel (%p1943) target = $region36
      $region35: #{tpu_custom_call.1} parent=5 // pred_region
        %s1946 = ssub.s32 %s11, 2
        // Predicated region
        $region37: #{tpu_custom_call.1} parent=35 // pred_check
          %p1947 = pneg %p87
        $region38: #{tpu_custom_call.1} parent=35 // pred_check_branch
          %1949 = sbr.rel (%p1947) target = $region40
        $region39: #{tpu_custom_call.1} parent=35 // pred_region
          %s1950 = sand.u32 %s72, 1
          %s1951 = scalar_lea.sflag [#allocation5], %s1950
          %s1952 = sand.u32 %s72, 1
          %s1953 = smul.addr %s1952, 128
          %s1954 = scalar_lea.vmem [#allocation4], %s1953
          %1956 = dma.done %s1951, 2048
        $region40: #{tpu_custom_call.1} parent=35 // pred_fallthru
          _
      $region36: #{tpu_custom_call.1} parent=5 // pred_fallthru
        _
    $region6: #{tpu_custom_call.1} parent=1 // loop_footer
      %s15 = sadd.s32 1, %s11
    $region7: #{tpu_custom_call.1} parent=1 // loop_footer_branch
      %10 = sbr.rel target = $region3
    $region8: #{tpu_custom_call.1} parent=1 // loop_exit
      _
    %1957 = vsyncpa [#allocation5], 1
    %s1958 = scalar_lea.sflag [#allocation5], 1
    %1959 = vsyncpa %s1958, 1

</llo_original>
